<compile_context>
chip_gen: v6e
topology: v6e:2x2x1
jax: 0.10.0
libtpu: 0.0.40
codegen_flags: <defaults>
</compile_context>

<pallas_src>
import functools

import jax
import jax.numpy as jnp
from jax import lax
from jax.experimental import pallas as pl
from jax.experimental.pallas import tpu as pltpu


def _round_up(x, m):
    return ((x + m - 1) // m) * m


# --------------------------------------------------------------------------
# Kernel: one tiled SAGEConv(normalize=True) layer.
# Grid = (M row-blocks [parallel], K col-blocks [arbitrary, reduction last]).
# --------------------------------------------------------------------------
def _sage_layer_kernel(a_ref, hb_ref, hs_ref, invd_ref, w_ref, b_ref,
                       out_ref, acc_ref, *, mode):
    """a_ref   : (tm, tk)   bf16 un-normalized edge counts A[i, j] = #edges j->i
       hb_ref  : (tk, hp)   bf16 node features (streamed aggregation operand)
       hs_ref  : (tm, hp)   f32  node features of this row block (lin_r/residual)
       invd_ref: (tm, 1)    f32  1 / max(in_degree, 1)
       w_ref   : (2*hp, hp) bf16 stacked [W_l ; W_r]
       b_ref   : (1, hp)    f32  bias of lin_l
       out_ref : (tm, hp)   f32
       acc_ref : (tm, hp)   f32  VMEM scratch accumulator for A @ h
    """
    k = pl.program_id(1)

    @pl.when(k == 0)
    def _init():
        acc_ref[...] = jnp.zeros_like(acc_ref)

    # Sum aggregation on the MXU bf16 path, f32 accumulation.
    acc_ref[...] += jnp.dot(a_ref[...], hb_ref[...],
                            preferred_element_type=jnp.float32)

    @pl.when(k == pl.num_programs(1) - 1)
    def _finalize():
        hs = hs_ref[...]
        # sum -> mean via per-row 1/deg (keeps the streamed bf16 A exact ints).
        aggr = acc_ref[...] * invd_ref[...]
        # Fused lin_l(aggr) + lin_r(hs): one K=2*hp bf16 matmul on the MXU.
        zin = jnp.concatenate(
            [aggr.astype(jnp.bfloat16), hs.astype(jnp.bfloat16)], axis=-1)
        z = jnp.dot(zin, w_ref[...], preferred_element_type=jnp.float32)
        z = z + b_ref[...]
        # Row-wise L2 normalize: z / max(||z||, 1e-12) == z * rsqrt(max(ss, 1e-24)).
        sumsq = jnp.sum(z * z, axis=-1, keepdims=True)
        z = z * lax.rsqrt(jnp.maximum(sumsq, 1e-24))
        if mode == "leaky":          # layer 1: leaky_relu(z, 0.01)
            z = jnp.where(z >= 0, z, 0.01 * z)
        else:                        # layer 2: residual (h1 + h2); hs IS h1
            z = z + hs
        out_ref[...] = z.astype(out_ref.dtype)


def _sage_pallas(a_cnt, h_bf16, h_f32, inv_deg, w_stk, bias, *, mode, tm, tk,
                 vmem_limit):
    n_pad = a_cnt.shape[0]
    hp = h_f32.shape[1]
    grid = (n_pad // tm, n_pad // tk)
    kernel = functools.partial(_sage_layer_kernel, mode=mode)
    return pl.pallas_call(
        kernel,
        out_shape=jax.ShapeDtypeStruct((n_pad, hp), jnp.float32),
        grid_spec=pltpu.PrefetchScalarGridSpec(
            num_scalar_prefetch=0,
            grid=grid,
            in_specs=[
                pl.BlockSpec((tm, tk), lambda i, k: (i, k)),      # A counts (bf16)
                pl.BlockSpec((tk, hp), lambda i, k: (k, 0)),      # h stream (bf16)
                pl.BlockSpec((tm, hp), lambda i, k: (i, 0)),      # h self rows (f32)
                pl.BlockSpec((tm, 1), lambda i, k: (i, 0)),       # 1/deg (f32)
                pl.BlockSpec((2 * hp, hp), lambda i, k: (0, 0)),  # [W_l ; W_r] (bf16)
                pl.BlockSpec((1, hp), lambda i, k: (0, 0)),       # b_l (f32)
            ],
            out_specs=pl.BlockSpec((tm, hp), lambda i, k: (i, 0)),
            scratch_shapes=[pltpu.VMEM((tm, hp), jnp.float32)],
        ),
        compiler_params=pltpu.CompilerParams(
            # Row blocks shard across TensorCores; the K reduction is serial.
            dimension_semantics=("parallel", "arbitrary"),
            vmem_limit_bytes=vmem_limit,
        ),
    )(a_cnt, h_bf16, h_f32, inv_deg, w_stk, bias)


def _vmem_budget_bytes(tm, tk, hp):
    """Derive the VMEM limit from the actual double-buffered tile working set."""
    a = 2 * tm * tk * 2                 # bf16 A tile, double-buffered
    hb = 2 * tk * hp * 2                # bf16 h stream
    hs = 2 * tm * hp * 4                # f32 self rows
    invd = 2 * tm * 128 * 4             # (tm, 1) tile, lane-padded pessimistically
    w = 2 * (2 * hp) * hp * 2           # stacked bf16 weights
    b = 2 * 8 * hp * 4                  # bias (sublane-padded)
    out = 2 * tm * hp * 4               # f32 output tile
    acc = tm * hp * 4                   # f32 scratch accumulator
    total = a + hb + hs + invd + w + b + out + acc
    # Generous margin for compiler-internal scratch, capped at v7x's 64 MiB.
    return int(min(max(2 * total, 16 * 1024 * 1024), 64 * 1024 * 1024))


# --------------------------------------------------------------------------
# Forward wrapper: padding, dense count adjacency, two layer calls.
# --------------------------------------------------------------------------
def gnn_forward(x, edge_index, params, *, block_m=512, block_k=512,
                vmem_limit_bytes=None):
    """x: [N, H] f32, edge_index: [2, E] int32, params: dict of weights."""
    n, h_dim = x.shape
    for blk in (block_m, block_k):
        q = blk // 128
        assert blk % 128 == 0 and (q & (q - 1)) == 0, (
            "block sizes must be power-of-two multiples of 128")

    hp = _round_up(h_dim, 128)          # full 128-lane vregs / MXU width
    n128 = _round_up(n, 128)

    def _clamp(t):                      # keep power-of-two * 128, <= n128
        while t > n128:
            t //= 2
        return t

    tm, tk = _clamp(block_m), _clamp(block_k)
    # Padding quantum is max(tm, tk); with pow2 tiles min | max (no lcm blowup).
    n_pad = _round_up(n, max(tm, tk))
    # Keep >= 2 row blocks so the "parallel" axis spans both v7x TensorCores.
    if n_pad // tm < 2 and tm >= 256:
        tm //= 2

    if vmem_limit_bytes is None:
        vmem_limit_bytes = _vmem_budget_bytes(tm, tk, hp)

    src = edge_index[0].astype(jnp.int32)
    dst = edge_index[1].astype(jnp.int32)

    # Dense adjacency as UN-normalized edge counts, built directly in bf16
    # (exact integers for per-pair multiplicities < 256); no f32 N^2
    # intermediate and no divide/cast re-materialization pass.  Padded
    # rows/cols stay zero, so padded nodes never contaminate real rows.
    # TODO(synk): for large sparse graphs replace this dense O(N^2) adjacency
    # with a dst-sorted edge-bucket gather/scatter aggregation (scalar
    # prefetch + manual DMA); the dense bf16 path caps out near ~50k nodes on
    # v5e's 16 GiB HBM.
    ones = jnp.ones(src.shape, jnp.bfloat16)
    a_cnt = jnp.zeros((n_pad, n_pad), jnp.bfloat16).at[dst, src].add(ones)
    deg = jnp.zeros((n_pad,), jnp.float32).at[dst].add(1.0)
    inv_deg = (1.0 / jnp.maximum(deg, 1.0)).reshape(n_pad, 1)

    def pad_w(w):
        return jnp.zeros((hp, hp), jnp.float32).at[:h_dim, :h_dim].set(w)

    def pad_b(b):
        return jnp.zeros((1, hp), jnp.float32).at[:, :h_dim].set(
            b.reshape(1, -1))

    # Stacked [W_l ; W_r] in bf16 -> single fused K=2*hp finalize matmul.
    w1 = jnp.concatenate([pad_w(params["wl1"]), pad_w(params["wr1"])],
                         axis=0).astype(jnp.bfloat16)
    w2 = jnp.concatenate([pad_w(params["wl2"]), pad_w(params["wr2"])],
                         axis=0).astype(jnp.bfloat16)
    b1, b2 = pad_b(params["bl1"]), pad_b(params["bl2"])

    x_p = jnp.zeros((n_pad, hp), jnp.float32).at[:n, :h_dim].set(x)

    # Layer 1: conv1 + leaky_relu.  The streamed aggregation operand is cast
    # to bf16 once here (hoisted), not per grid step inside the kernel.
    h1 = _sage_pallas(a_cnt, x_p.astype(jnp.bfloat16), x_p, inv_deg, w1, b1,
                      mode="leaky", tm=tm, tk=tk, vmem_limit=vmem_limit_bytes)
    # Layer 2: conv2 + residual (h1 + h2).  Padded rows of h1 are non-zero
    # (normalized bias) but padded A columns are zero, so they cannot leak.
    out = _sage_pallas(a_cnt, h1.astype(jnp.bfloat16), h1, inv_deg, w2, b2,
                       mode="residual", tm=tm, tk=tk,
                       vmem_limit=vmem_limit_bytes)
    return out[:n, :h_dim]


# --------------------------------------------------------------------------
# Pure-JAX f32 reference (for verification).
# --------------------------------------------------------------------------
def gnn_reference(x, edge_index, params):
    n = x.shape[0]
    src, dst = edge_index[0], edge_index[1]
    a = jnp.zeros((n, n), jnp.float32).at[dst, src].add(1.0)
    a = a / jnp.maximum(a.sum(axis=1, keepdims=True), 1.0)

    def sage(h, wl, bl, wr):
        z = (a @ h) @ wl + bl + h @ wr
        return z / jnp.maximum(jnp.linalg.norm(z, axis=-1, keepdims=True),
                               1e-12)

    z1 = sage(x, params["wl1"], params["bl1"], params["wr1"])
    h1 = jnp.where(z1 >= 0, z1, 0.01 * z1)
    h2 = sage(h1, params["wl2"], params["bl2"], params["wr2"])
    return h1 + h2


def init_params(key, hidden):
    ks = jax.random.split(key, 6)
    s = 1.0 / jnp.sqrt(hidden)
    return {
        # weights stored as [in, out] (already transposed vs torch.nn.Linear)
        "wl1": jax.random.uniform(ks[0], (hidden, hidden), jnp.float32, -s, s),
        "wr1": jax.random.uniform(ks[1], (hidden, hidden), jnp.float32, -s, s),
        "bl1": jax.random.uniform(ks[2], (1, hidden), jnp.float32, -s, s),
        "wl2": jax.random.uniform(ks[3], (hidden, hidden), jnp.float32, -s, s),
        "wr2": jax.random.uniform(ks[4], (hidden, hidden), jnp.float32, -s, s),
        "bl2": jax.random.uniform(ks[5], (1, hidden), jnp.float32, -s, s),
    }


if __name__ == "__main__":
    # Small but grid-exercising shapes: N=256 nodes with block_m=256 (halved
    # to 128 by the >=2-row-blocks rule) and block_k=128 gives a (2, 2) grid
    # (parallel row blocks + a 2-step K reduction); hidden=32 is padded to 128
    # lanes inside the wrapper.
    N, H, E = 256, 32, 1024
    key = jax.random.PRNGKey(0)
    k_x, k_e, k_p = jax.random.split(key, 3)

    x = jax.random.normal(k_x, (N, H), jnp.float32)
    edge_index = jax.random.randint(k_e, (2, E), 0, N, jnp.int32)
    params = init_params(k_p, H)

    out = gnn_forward(x, edge_index, params, block_m=256, block_k=128)
    out = jax.block_until_ready(out)

    ref = gnn_reference(x, edge_index, params)
    assert out.shape == (N, H)
    # bf16 h stream + bf16 stacked weights (per perf review) consume some
    # tolerance vs the pure-f32 reference; the adjacency itself is now exact.
    assert jnp.allclose(out, ref, atol=2e-2, rtol=2e-2), "mismatch vs reference"

    print("KERNEL_OK")
</pallas_src>

<mosaic_0001>
module attributes {stable_mosaic.version = 11 : i64} {
  func.func @_sage_layer_kernel(%arg0: i32, %arg1: i32, %arg2: memref<128x128xbf16, #tpu.memory_space<vmem>>, %arg3: memref<128x128xbf16, #tpu.memory_space<vmem>>, %arg4: memref<128x128xf32, #tpu.memory_space<vmem>>, %arg5: memref<128x1xf32, #tpu.memory_space<vmem>>, %arg6: memref<256x128xbf16, #tpu.memory_space<vmem>>, %arg7: memref<1x128xf32, #tpu.memory_space<vmem>>, %arg8: memref<128x128xf32, #tpu.memory_space<vmem>>, %arg9: memref<128x128xf32, #tpu.memory_space<vmem>>) attributes {dimension_semantics = [#tpu.dimension_semantics<parallel>, #tpu.dimension_semantics<arbitrary>], iteration_bounds = array<i64: 2, 2>, scalar_prefetch = 0 : i64, scratch_operands = 1 : i64, tpu.core_type = #tpu.core_type<tc>, window_params = [{transform_indices = @transform_0, window_bounds = array<i64: 128, 128>}, {transform_indices = @transform_1, window_bounds = array<i64: 128, 128>}, {transform_indices = @transform_2, window_bounds = array<i64: 128, 128>}, {transform_indices = @transform_3, window_bounds = array<i64: 128, 1>}, {pipeline_mode = #tpu.pipeline_mode<synchronous>, transform_indices = @transform_4, window_bounds = array<i64: 256, 128>}, {pipeline_mode = #tpu.pipeline_mode<synchronous>, transform_indices = @transform_5, window_bounds = array<i64: 1, 128>}, {transform_indices = @transform_6, window_bounds = array<i64: 128, 128>}]} {
    %c0_i32 = arith.constant 0 : i32
    %0 = arith.cmpi eq, %arg1, %c0_i32 : i32
    %1 = arith.extui %0 : i1 to i32
    %c0_i32_0 = arith.constant 0 : i32
    %2 = arith.cmpi ne, %1, %c0_i32_0 : i32
    scf.if %2 {
      %cst_9 = arith.constant 0.000000e+00 : f32
      %12 = vector.broadcast %cst_9 : f32 to vector<128x128xf32>
      %c0_10 = arith.constant 0 : index
      %c0_11 = arith.constant 0 : index
      %13 = vector.load %arg9[%c0_10, %c0_11] : memref<128x128xf32, #tpu.memory_space<vmem>>, vector<128x128xf32>
      tpu.vector_store %arg9[%c0_10, %c0_11], %12 {strides = array<i32>} : memref<128x128xf32, #tpu.memory_space<vmem>>, vector<128x128xf32>,
    } else {
    }
    %c0 = arith.constant 0 : index
    %c0_1 = arith.constant 0 : index
    %3 = vector.load %arg9[%c0, %c0_1] : memref<128x128xf32, #tpu.memory_space<vmem>>, vector<128x128xf32>
    %c0_2 = arith.constant 0 : index
    %c0_3 = arith.constant 0 : index
    %4 = vector.load %arg2[%c0_2, %c0_3] : memref<128x128xbf16, #tpu.memory_space<vmem>>, vector<128x128xbf16>
    %c0_4 = arith.constant 0 : index
    %c0_5 = arith.constant 0 : index
    %5 = vector.load %arg3[%c0_4, %c0_5] : memref<128x128xbf16, #tpu.memory_space<vmem>>, vector<128x128xbf16>
    %cst = arith.constant dense<0.000000e+00> : vector<128x128xf32>
    %6 = tpu.matmul %4, %5, %cst {dimension_numbers = #tpu.dot_dimension_numbers<[1], [0], [0], [1], [0, 0, 1, 1], [], []>} : vector<128x128xbf16>, vector<128x128xbf16>, vector<128x128xf32> -> vector<128x128xf32>
    %7 = arith.addf %3, %6 : vector<128x128xf32>
    %c0_6 = arith.constant 0 : index
    %c0_7 = arith.constant 0 : index
    %8 = vector.load %arg9[%c0_6, %c0_7] : memref<128x128xf32, #tpu.memory_space<vmem>>, vector<128x128xf32>
    tpu.vector_store %arg9[%c0_6, %c0_7], %7 {strides = array<i32>} : memref<128x128xf32, #tpu.memory_space<vmem>>, vector<128x128xf32>,
    %c1_i32 = arith.constant 1 : i32
    %9 = arith.cmpi eq, %arg1, %c1_i32 : i32
    %10 = arith.extui %9 : i1 to i32
    %c0_i32_8 = arith.constant 0 : i32
    %11 = arith.cmpi ne, %10, %c0_i32_8 : i32
    scf.if %11 {
      %c0_9 = arith.constant 0 : index
      %c0_10 = arith.constant 0 : index
      %12 = vector.load %arg4[%c0_9, %c0_10] : memref<128x128xf32, #tpu.memory_space<vmem>>, vector<128x128xf32>
      %c0_11 = arith.constant 0 : index
      %c0_12 = arith.constant 0 : index
      %13 = vector.load %arg9[%c0_11, %c0_12] : memref<128x128xf32, #tpu.memory_space<vmem>>, vector<128x128xf32>
      %c0_13 = arith.constant 0 : index
      %c0_14 = arith.constant 0 : index
      %14 = vector.load %arg5[%c0_13, %c0_14] : memref<128x1xf32, #tpu.memory_space<vmem>>, vector<128x1xf32>
      %15 = vector.broadcast %14 : vector<128x1xf32> to vector<128x128xf32>
      %16 = arith.mulf %13, %15 : vector<128x128xf32>
      %17 = arith.truncf %16 : vector<128x128xf32> to vector<128x128xbf16>
      %18 = arith.truncf %12 : vector<128x128xf32> to vector<128x128xbf16>
      %19 = tpu.concatenate %17, %18 in 1 : vector<128x128xbf16>, vector<128x128xbf16> -> vector<128x256xbf16>
      %c0_15 = arith.constant 0 : index
      %c0_16 = arith.constant 0 : index
      %20 = vector.load %arg6[%c0_15, %c0_16] : memref<256x128xbf16, #tpu.memory_space<vmem>>, vector<256x128xbf16>
      %cst_17 = arith.constant dense<0.000000e+00> : vector<128x128xf32>
      %21 = tpu.matmul %19, %20, %cst_17 {dimension_numbers = #tpu.dot_dimension_numbers<[1], [0], [0], [1], [0, 0, 1, 1], [], []>} : vector<128x256xbf16>, vector<256x128xbf16>, vector<128x128xf32> -> vector<128x128xf32>
      %c0_18 = arith.constant 0 : index
      %c0_19 = arith.constant 0 : index
      %22 = vector.load %arg7[%c0_18, %c0_19] : memref<1x128xf32, #tpu.memory_space<vmem>>, vector<1x128xf32>
      %23 = vector.broadcast %22 : vector<1x128xf32> to vector<128x128xf32>
      %24 = arith.addf %21, %23 : vector<128x128xf32>
      %25 = arith.mulf %24, %24 : vector<128x128xf32>
      %cst_20 = arith.constant dense<0.000000e+00> : vector<128xf32>
      %26 = vector.multi_reduction <add>, %25, %cst_20 [1] : vector<128x128xf32> to vector<128xf32>
      %27 = vector.shape_cast %26 : vector<128xf32> to vector<128x1xf32>
      %cst_21 = arith.constant 1.000000e-24 : f32
      %28 = vector.broadcast %cst_21 : f32 to vector<128x1xf32>
      %29 = arith.maximumf %27, %28 : vector<128x1xf32>
      %30 = math.rsqrt %29 : vector<128x1xf32>
      %31 = vector.broadcast %30 : vector<128x1xf32> to vector<128x128xf32>
      %32 = arith.mulf %24, %31 : vector<128x128xf32>
      %cst_22 = arith.constant 0.000000e+00 : f32
      %33 = vector.broadcast %cst_22 : f32 to vector<128x128xf32>
      %34 = arith.cmpf oge, %32, %33 : vector<128x128xf32>
      %cst_23 = arith.constant 0.00999999977 : f32
      %35 = vector.broadcast %cst_23 : f32 to vector<128x128xf32>
      %36 = arith.mulf %35, %32 : vector<128x128xf32>
      %37 = arith.select %34, %32, %36 : vector<128x128xi1>, vector<128x128xf32>
      %c0_24 = arith.constant 0 : index
      %c0_25 = arith.constant 0 : index
      %38 = vector.load %arg8[%c0_24, %c0_25] : memref<128x128xf32, #tpu.memory_space<vmem>>, vector<128x128xf32>
      tpu.vector_store %arg8[%c0_24, %c0_25], %37 {strides = array<i32>} : memref<128x128xf32, #tpu.memory_space<vmem>>, vector<128x128xf32>,
    } else {
    }
    return
  }
  func.func @transform_0(%arg0: i32, %arg1: i32) -> (i32, i32) {
    %c0_i32 = arith.constant 0 : i32
    return %arg0, %arg1 : i32, i32
  }
  func.func @transform_1(%arg0: i32, %arg1: i32) -> (i32, i32) {
    %c0_i32 = arith.constant 0 : i32
    %c0_i32_0 = arith.constant 0 : i32
    return %arg1, %c0_i32 : i32, i32
  }
  func.func @transform_2(%arg0: i32, %arg1: i32) -> (i32, i32) {
    %c0_i32 = arith.constant 0 : i32
    %c0_i32_0 = arith.constant 0 : i32
    return %arg0, %c0_i32 : i32, i32
  }
  func.func @transform_3(%arg0: i32, %arg1: i32) -> (i32, i32) {
    %c0_i32 = arith.constant 0 : i32
    %c0_i32_0 = arith.constant 0 : i32
    return %arg0, %c0_i32 : i32, i32
  }
  func.func @transform_4(%arg0: i32, %arg1: i32) -> (i32, i32) {
    %c0_i32 = arith.constant 0 : i32
    %c0_i32_0 = arith.constant 0 : i32
    %c0_i32_1 = arith.constant 0 : i32
    return %c0_i32, %c0_i32_0 : i32, i32
  }
  func.func @transform_5(%arg0: i32, %arg1: i32) -> (i32, i32) {
    %c0_i32 = arith.constant 0 : i32
    %c0_i32_0 = arith.constant 0 : i32
    %c0_i32_1 = arith.constant 0 : i32
    return %c0_i32, %c0_i32_0 : i32, i32
  }
  func.func @transform_6(%arg0: i32, %arg1: i32) -> (i32, i32) {
    %c0_i32 = arith.constant 0 : i32
    %c0_i32_0 = arith.constant 0 : i32
    return %arg0, %c0_i32 : i32, i32
  }
}

</mosaic_0001>

<llo_original>
// kernel: tpu_custom_call.1
$region0: #{tpu_custom_call.1}
  #allocation0 [shape = 'u32[]', space=smem, size = 0x4, offset = 0x4, fixed_abs, tag = 'smem constant byte address 0x4 - core index']
  #allocation1 [shape = 'u32[144,128]{1,0:T(1,128)}', space=vmem, size = 0x12000, scoped, tag = 'internal scratch']
  #allocation2 [shape = 'f32[128,128]{1,0:T(8,128)}', space=vmem, size = 0x10000, scoped, tag = 'scratch operand']
  %s0 = inlined_call_operand.vmem [shape: bf16[256,256], index: 0, kind: input, shape index: {}]
  %s1 = inlined_call_operand.hbm [shape: bf16[256,128], index: 1, kind: input, shape index: {}]
  %s2 = inlined_call_operand.hbm [shape: f32[256,128], index: 2, kind: input, shape index: {}]
  %s3 = inlined_call_operand.vmem [shape: f32[256,1], index: 3, kind: input, shape index: {}]
  %s4 = inlined_call_operand.hbm [shape: bf16[256,128], index: 4, kind: input, shape index: {}]
  %s5 = inlined_call_operand.vmem [shape: f32[1,128], index: 5, kind: input, shape index: {}]
  %s6 = inlined_call_operand.hbm [shape: f32[256,128], index: 6, kind: output, shape index: {}]
  %s7 = sld [smem:[#allocation0]]
  $region118: #{tpu_custom_call.1} parent=0
    _
  %s9 = ssub.s32 1, %s7
  %s10 = scalar_select 0, %s9, %s7
  $region1: #{tpu_custom_call.1} parent=0
    #allocation3 [shape = 'u8[65536]{0}', space=vmem, size = 0x10000, scoped, tag = 'input window, operand 0']
    #allocation4 [shape = 'u8[65536]{0}', space=vmem, size = 0x10000, scoped, tag = 'input window, operand 1']
    #allocation5 [shape = 's32[2]{0}', space=sflag, size = 0x8, scoped, tag = 'scoped memory for tpu_custom_call.1']
    #allocation6 [shape = 's32[2]{0}', space=sflag, size = 0x8, scoped, tag = 'scoped memory for tpu_custom_call.1']
    #allocation7 [shape = 'u8[131072]{0}', space=vmem, size = 0x20000, scoped, tag = 'input window, operand 2']
    #allocation8 [shape = 's32[2]{0}', space=sflag, size = 0x8, scoped, tag = 'scoped memory for tpu_custom_call.1']
    #allocation9 [shape = 'u8[65536]{0}', space=vmem, size = 0x10000, scoped, tag = 'input window, operand 4, single buffered']
    #allocation10 [shape = 'u8[131072]{0}', space=vmem, size = 0x20000, scoped, tag = 'output window, operand 0']
    %11 = vsyncpa [#allocation5], 0
    %s12 = scalar_lea.sflag [#allocation5], 1
    %13 = vsyncpa %s12, 0
    %14 = vsyncpa [#allocation8], 0
    %s15 = scalar_lea.sflag [#allocation8], 1
    %16 = vsyncpa %s15, 0
    %17 = vsyncpa [#allocation6], 0
    %s18 = scalar_lea.sflag [#allocation6], 1
    %19 = vsyncpa %s18, 0
    loop: start=0, step=1, limit=6
    $region2: #{tpu_custom_call.1} parent=1 // loop_pre_header
      _
    $region3: #{tpu_custom_call.1} parent=1 // loop_header
      %s21 = sphi 0, %s25
      %p22 = scmp.ge.s32.totalorder %s21, 6
      %s28 = sphi 0, %s40
      %s29 = sphi 0, %s36
      %s30 = sphi 0, %s28
      %s31 = sphi 0, %s29
      %s32 = sphi 0, %s30
      %s33 = sphi 0, %s31
      %s45 = sphi 0, %s47
      %s48 = sphi 0, %s45
      %s49 = sphi 0, %s48
      %s65 = sphi 0, %s49
      %s71 = sphi 0, %s73
      %s74 = sphi 0, %s71
      %s75 = sphi 0, %s74
      %s91 = sphi 0, %s75
      %s97 = sphi 0, %s99
      %s100 = sphi 0, %s97
      %s101 = sphi 0, %s100
      %s117 = sphi 0, %s101
      %s123 = sphi 0, %s125
      %s126 = sphi 0, %s123
      %s127 = sphi 0, %s126
      %s143 = sphi 0, %s127
      %s147 = sphi 0, %s147
      %s149 = sphi 0, %s147
      %s150 = sphi 0, %s149
      %s164 = sphi 0, %s150
      %s168 = sphi 0, %s168
      %s170 = sphi 0, %s168
      %s171 = sphi 0, %s170
      %s185 = sphi 0, %s171
      %s191 = sphi 0, %s193
      %s194 = sphi 0, %s191
      %s195 = sphi 0, %s194
      %s211 = sphi 0, %s195
    $region4: #{tpu_custom_call.1} parent=1 // loop_header_branch
      %24 = sbr.rel (%p22) target = $region8
    $region5: #{tpu_custom_call.1} parent=1 // loop_body
      %s26 = ssub.s32 %s21, 1
      %s27 = ssub.s32 %s21, 2
      %s34 = sadd.s32 1, %s29
      %p35 = scmp.ge.s32.totalorder %s34, 2
      %s36 = scalar_select %p35, 0, %s34
      %s37 = sadd.s32 1, %s28
      %s38 = scalar_select %p35, %s37, %s28
      %p39 = scmp.ge.s32.totalorder %s38, 2
      %s40 = scalar_select %p39, 0, %s38
      %s41 = ssub.s32 %s28, %s40
      %s42 = ssub.s32 %s29, %s36
      %s43 = sor.u32 %s41, %s42
      %p44 = scmp.eq.s32.totalorder %s43, 0
      %s46 = sadd.s32 %s45, 1
      %s47 = scalar_select %p44, %s45, %s46
      %p50 = pneg %p44
      %p51 = scmp.eq.s32.totalorder %s21, 3
      %p52 = por %p50, %p51
      %p53 = scmp.ne.s32.totalorder %s45, %s48
      %p54 = scmp.eq.s32.totalorder %s21, 0
      %p55 = por %p53, %p54
      %p56 = scmp.ne.s32.totalorder %s45, %s48
      %p57 = scmp.eq.s32.totalorder %s26, 3
      %p58 = por %p56, %p57
      %p59 = scmp.ne.s32.totalorder %s48, %s49
      %p60 = scmp.eq.s32.totalorder %s26, 0
      %p61 = por %p59, %p60
      %p62 = scmp.ne.s32.totalorder %s48, %s49
      %p63 = scmp.eq.s32.totalorder %s27, 3
      %p64 = por %p62, %p63
      %p66 = scmp.ne.s32.totalorder %s49, %s65
      %p67 = scmp.eq.s32.totalorder %s27, 0
      %p68 = por %p66, %p67
      %s69 = ssub.s32 %s29, %s36
      %p70 = scmp.eq.s32.totalorder %s69, 0
      %s72 = sadd.s32 %s71, 1
      %s73 = scalar_select %p70, %s71, %s72
      %p76 = pneg %p70
      %p77 = scmp.eq.s32.totalorder %s21, 3
      %p78 = por %p76, %p77
      %p79 = scmp.ne.s32.totalorder %s71, %s74
      %p80 = scmp.eq.s32.totalorder %s21, 0
      %p81 = por %p79, %p80
      %p82 = scmp.ne.s32.totalorder %s71, %s74
      %p83 = scmp.eq.s32.totalorder %s26, 3
      %p84 = por %p82, %p83
      %p85 = scmp.ne.s32.totalorder %s74, %s75
      %p86 = scmp.eq.s32.totalorder %s26, 0
      %p87 = por %p85, %p86
      %p88 = scmp.ne.s32.totalorder %s74, %s75
      %p89 = scmp.eq.s32.totalorder %s27, 3
      %p90 = por %p88, %p89
      %p92 = scmp.ne.s32.totalorder %s75, %s91
      %p93 = scmp.eq.s32.totalorder %s27, 0
      %p94 = por %p92, %p93
      %s95 = ssub.s32 %s28, %s40
      %p96 = scmp.eq.s32.totalorder %s95, 0
      %s98 = sadd.s32 %s97, 1
      %s99 = scalar_select %p96, %s97, %s98
      %p102 = pneg %p96
      %p103 = scmp.eq.s32.totalorder %s21, 3
      %p104 = por %p102, %p103
      %p105 = scmp.ne.s32.totalorder %s97, %s100
      %p106 = scmp.eq.s32.totalorder %s21, 0
      %p107 = por %p105, %p106
      %p108 = scmp.ne.s32.totalorder %s97, %s100
      %p109 = scmp.eq.s32.totalorder %s26, 3
      %p110 = por %p108, %p109
      %p111 = scmp.ne.s32.totalorder %s100, %s101
      %p112 = scmp.eq.s32.totalorder %s26, 0
      %p113 = por %p111, %p112
      %p114 = scmp.ne.s32.totalorder %s100, %s101
      %p115 = scmp.eq.s32.totalorder %s27, 3
      %p116 = por %p114, %p115
      %p118 = scmp.ne.s32.totalorder %s101, %s117
      %p119 = scmp.eq.s32.totalorder %s27, 0
      %p120 = por %p118, %p119
      %s121 = ssub.s32 %s28, %s40
      %p122 = scmp.eq.s32.totalorder %s121, 0
      %s124 = sadd.s32 %s123, 1
      %s125 = scalar_select %p122, %s123, %s124
      %p128 = pneg %p122
      %p129 = scmp.eq.s32.totalorder %s21, 3
      %p130 = por %p128, %p129
      %p131 = scmp.ne.s32.totalorder %s123, %s126
      %p132 = scmp.eq.s32.totalorder %s21, 0
      %p133 = por %p131, %p132
      %p134 = scmp.ne.s32.totalorder %s123, %s126
      %p135 = scmp.eq.s32.totalorder %s26, 3
      %p136 = por %p134, %p135
      %p137 = scmp.ne.s32.totalorder %s126, %s127
      %p138 = scmp.eq.s32.totalorder %s26, 0
      %p139 = por %p137, %p138
      %p140 = scmp.ne.s32.totalorder %s126, %s127
      %p141 = scmp.eq.s32.totalorder %s27, 3
      %p142 = por %p140, %p141
      %p144 = scmp.ne.s32.totalorder %s127, %s143
      %p145 = scmp.eq.s32.totalorder %s27, 0
      %p146 = por %p144, %p145
      %s148 = sadd.s32 %s147, 1
      %p151 = scmp.eq.s32.totalorder %s21, 3
      %p152 = scmp.ne.s32.totalorder %s147, %s149
      %p153 = scmp.eq.s32.totalorder %s21, 0
      %p154 = por %p152, %p153
      %p155 = scmp.ne.s32.totalorder %s147, %s149
      %p156 = scmp.eq.s32.totalorder %s26, 3
      %p157 = por %p155, %p156
      %p158 = scmp.ne.s32.totalorder %s149, %s150
      %p159 = scmp.eq.s32.totalorder %s26, 0
      %p160 = por %p158, %p159
      %p161 = scmp.ne.s32.totalorder %s149, %s150
      %p162 = scmp.eq.s32.totalorder %s27, 3
      %p163 = por %p161, %p162
      %p165 = scmp.ne.s32.totalorder %s150, %s164
      %p166 = scmp.eq.s32.totalorder %s27, 0
      %p167 = por %p165, %p166
      %s169 = sadd.s32 %s168, 1
      %p172 = scmp.eq.s32.totalorder %s21, 3
      %p173 = scmp.ne.s32.totalorder %s168, %s170
      %p174 = scmp.eq.s32.totalorder %s21, 0
      %p175 = por %p173, %p174
      %p176 = scmp.ne.s32.totalorder %s168, %s170
      %p177 = scmp.eq.s32.totalorder %s26, 3
      %p178 = por %p176, %p177
      %p179 = scmp.ne.s32.totalorder %s170, %s171
      %p180 = scmp.eq.s32.totalorder %s26, 0
      %p181 = por %p179, %p180
      %p182 = scmp.ne.s32.totalorder %s170, %s171
      %p183 = scmp.eq.s32.totalorder %s27, 3
      %p184 = por %p182, %p183
      %p186 = scmp.ne.s32.totalorder %s171, %s185
      %p187 = scmp.eq.s32.totalorder %s27, 0
      %p188 = por %p186, %p187
      %s189 = ssub.s32 %s28, %s40
      %p190 = scmp.eq.s32.totalorder %s189, 0
      %s192 = sadd.s32 %s191, 1
      %s193 = scalar_select %p190, %s191, %s192
      %p196 = pneg %p190
      %p197 = scmp.eq.s32.totalorder %s21, 3
      %p198 = por %p196, %p197
      %p199 = scmp.ne.s32.totalorder %s191, %s194
      %p200 = scmp.eq.s32.totalorder %s21, 0
      %p201 = por %p199, %p200
      %p202 = scmp.ne.s32.totalorder %s191, %s194
      %p203 = scmp.eq.s32.totalorder %s26, 3
      %p204 = por %p202, %p203
      %p205 = scmp.ne.s32.totalorder %s194, %s195
      %p206 = scmp.eq.s32.totalorder %s26, 0
      %p207 = por %p205, %p206
      %p208 = scmp.ne.s32.totalorder %s194, %s195
      %p209 = scmp.eq.s32.totalorder %s27, 3
      %p210 = por %p208, %p209
      %p212 = scmp.ne.s32.totalorder %s195, %s211
      %p213 = scmp.eq.s32.totalorder %s27, 0
      %p214 = por %p212, %p213
      %p215 = scmp.le.s32.totalorder 1, %s21
      %p216 = scmp.lt.s32.totalorder %s21, 5
      %p217 = pnand %p215, %p216
      %p218 = pneg %p217
      // Predicated region
      $region9: #{tpu_custom_call.1} parent=5 // pred_check
        _
      $region10: #{tpu_custom_call.1} parent=5 // pred_check_branch
        %220 = sbr.rel (%p217) target = $region12
      $region11: #{tpu_custom_call.1} parent=5 // pred_region
        %s221 = ssub.s32 %s21, 1
        // Predicated region
        $region13: #{tpu_custom_call.1} parent=11 // pred_check
          %p222 = pneg %p160
        $region14: #{tpu_custom_call.1} parent=11 // pred_check_branch
          %224 = sbr.rel (%p222) target = $region16
        $region15: #{tpu_custom_call.1} parent=11 // pred_region
          %s226 = ssub.s32 2048, 2048
          %227 = vsyncadd [#allocation8], %s226
          %s228 = sshll.u32 [#allocation9], 4
          %s229 = int_to_ptr.vmem [resolvable:$true] %s228
          %234 = dma.hbm_to_vmem [thread:$0]  %s4, 2048, %s229, [#allocation8], 64, 64, 4
        $region16: #{tpu_custom_call.1} parent=11 // pred_fallthru
          _
        // Predicated region
        $region17: #{tpu_custom_call.1} parent=11 // pred_check
          %p235 = pneg %p181
        $region18: #{tpu_custom_call.1} parent=11 // pred_check_branch
          %237 = sbr.rel (%p235) target = $region20
        $region19: #{tpu_custom_call.1} parent=11 // pred_region
          _
        $region20: #{tpu_custom_call.1} parent=11 // pred_fallthru
          _
      $region12: #{tpu_custom_call.1} parent=5 // pred_fallthru
        _
      %p238 = scmp.lt.s32.totalorder %s21, 4
      // Predicated region
      $region21: #{tpu_custom_call.1} parent=5 // pred_check
        %p239 = pneg %p238
      $region22: #{tpu_custom_call.1} parent=5 // pred_check_branch
        %241 = sbr.rel (%p239) target = $region24
      $region23: #{tpu_custom_call.1} parent=5 // pred_region
        // Predicated region
        $region25: #{tpu_custom_call.1} parent=23 // pred_check
          %p242 = pneg %p55
        $region26: #{tpu_custom_call.1} parent=23 // pred_check_branch
          %244 = sbr.rel (%p242) target = $region28
        $region27: #{tpu_custom_call.1} parent=23 // pred_region
          %s245 = sand.u32 %s45, 1
          %s246 = sand.u32 %s45, 1
          %s247 = smul.addr %s246, 64
          %s248 = scalar_lea.vmem [#allocation3], %s247
          %s249 = smul.u32 16, %s28
          %s250 = smul.addr %s249, 2
          %s251 = sadd.s32 %s29, %s250
          %s252 = smul.addr %s251, 4
          %s253 = scalar_lea.vmem %s0, %s252
          // Predicated region
          $region29: #{tpu_custom_call.1} parent=27 // pred_check
            _
          $region30: #{tpu_custom_call.1} parent=27 // pred_check_branch
            %255 = sbr.rel (0) target = $region32
          $region31: #{tpu_custom_call.1} parent=27 // pred_region
            // Predicated region
            $region33: #{tpu_custom_call.1} parent=31 // pred_check
              _
            $region34: #{tpu_custom_call.1} parent=31 // pred_check_branch
              %257 = sbr.rel target = $region36
            $region35: #{tpu_custom_call.1} parent=31 // pred_region
              // Predicated region
              $region48: #{tpu_custom_call.1} parent=35 // pred_check
                _
              $region49: #{tpu_custom_call.1} parent=35 // pred_check_branch
                %303 = sbr.rel (0) target = $region51
              $region50: #{tpu_custom_call.1} parent=35 // pred_region
                loop: start=0, step=1, limit=1
                $region52: #{tpu_custom_call.1} parent=50 // loop_pre_header
                  _
                $region53: #{tpu_custom_call.1} parent=50 // loop_header
                  %s305 = sphi 0, %s309
                  %p306 = scmp.ge.s32.totalorder %s305, 1
                  %s310 = sphi %s253, %s253
                  %s311 = sphi %s248, %s248
                $region54: #{tpu_custom_call.1} parent=50 // loop_header_branch
                  %308 = sbr.rel (%p306) target = $region58
                $region55: #{tpu_custom_call.1} parent=50 // loop_body
                  _
                $region56: #{tpu_custom_call.1} parent=50 // loop_footer
                  %s309 = sadd.s32 1, %s305
                $region57: #{tpu_custom_call.1} parent=50 // loop_footer_branch
                  %304 = sbr.rel target = $region53
                $region58: #{tpu_custom_call.1} parent=50 // loop_exit
                  _
                %s313 = ssub.s32 16, 1
                loop: start=0, step=1, limit=1
                $region59: #{tpu_custom_call.1} parent=50 // loop_pre_header
                  _
                $region60: #{tpu_custom_call.1} parent=50 // loop_header
                  %s315 = sphi 0, %s319
                  %p316 = scmp.ge.s32.totalorder %s315, 1
                  %s320 = sphi %s253, %s253
                  %s321 = sphi %s248, %s248
                $region61: #{tpu_custom_call.1} parent=50 // loop_header_branch
                  %318 = sbr.rel (%p316) target = $region65
                $region62: #{tpu_custom_call.1} parent=50 // loop_body
                  %v322 = vld [vmem:[%s320] sm:%s313]
                  %323 = vst [vmem:[%s321] sm:%s313] %v322
                  %v324 = vld [vmem:[%s320 + $0x8] sm:%s313]
                  %325 = vst [vmem:[%s321 + $0x4] sm:%s313] %v324
                  %v326 = vld [vmem:[%s320 + $0x10] sm:%s313]
                  %327 = vst [vmem:[%s321 + $0x8] sm:%s313] %v326
                  %v328 = vld [vmem:[%s320 + $0x18] sm:%s313]
                  %329 = vst [vmem:[%s321 + $0xc] sm:%s313] %v328
                  %v330 = vld [vmem:[%s320 + $0x20] sm:%s313]
                  %331 = vst [vmem:[%s321 + $0x10] sm:%s313] %v330
                  %v332 = vld [vmem:[%s320 + $0x28] sm:%s313]
                  %333 = vst [vmem:[%s321 + $0x14] sm:%s313] %v332
                  %v334 = vld [vmem:[%s320 + $0x30] sm:%s313]
                  %335 = vst [vmem:[%s321 + $0x18] sm:%s313] %v334
                  %v336 = vld [vmem:[%s320 + $0x38] sm:%s313]
                  %337 = vst [vmem:[%s321 + $0x1c] sm:%s313] %v336
                  %v338 = vld [vmem:[%s320 + $0x40] sm:%s313]
                  %339 = vst [vmem:[%s321 + $0x20] sm:%s313] %v338
                  %v340 = vld [vmem:[%s320 + $0x48] sm:%s313]
                  %341 = vst [vmem:[%s321 + $0x24] sm:%s313] %v340
                  %v342 = vld [vmem:[%s320 + $0x50] sm:%s313]
                  %343 = vst [vmem:[%s321 + $0x28] sm:%s313] %v342
                  %v344 = vld [vmem:[%s320 + $0x58] sm:%s313]
                  %345 = vst [vmem:[%s321 + $0x2c] sm:%s313] %v344
                  %v346 = vld [vmem:[%s320 + $0x60] sm:%s313]
                  %347 = vst [vmem:[%s321 + $0x30] sm:%s313] %v346
                  %v348 = vld [vmem:[%s320 + $0x68] sm:%s313]
                  %349 = vst [vmem:[%s321 + $0x34] sm:%s313] %v348
                  %v350 = vld [vmem:[%s320 + $0x70] sm:%s313]
                  %351 = vst [vmem:[%s321 + $0x38] sm:%s313] %v350
                  %v352 = vld [vmem:[%s320 + $0x78] sm:%s313]
                  %353 = vst [vmem:[%s321 + $0x3c] sm:%s313] %v352
                $region63: #{tpu_custom_call.1} parent=50 // loop_footer
                  %s319 = sadd.s32 1, %s315
                $region64: #{tpu_custom_call.1} parent=50 // loop_footer_branch
                  %314 = sbr.rel target = $region60
                $region65: #{tpu_custom_call.1} parent=50 // loop_exit
                  _
              $region51: #{tpu_custom_call.1} parent=35 // pred_fallthru
                _
            $region36: #{tpu_custom_call.1} parent=31 // pred_fallthru
              _
            // Predicated region
            $region37: #{tpu_custom_call.1} parent=31 // pred_check
              _
            $region38: #{tpu_custom_call.1} parent=31 // pred_check_branch
              %259 = sbr.rel (0) target = $region40
            $region39: #{tpu_custom_call.1} parent=31 // pred_region
              %s261 = ssub.s32 16, 1
              loop: start=0, step=1, limit=1
              $region41: #{tpu_custom_call.1} parent=39 // loop_pre_header
                _
              $region42: #{tpu_custom_call.1} parent=39 // loop_header
                %s263 = sphi 0, %s267
                %p264 = scmp.ge.s32.totalorder %s263, 1
                %s268 = sphi %s253, %s253
                %s269 = sphi %s248, %s248
              $region43: #{tpu_custom_call.1} parent=39 // loop_header_branch
                %266 = sbr.rel (%p264) target = $region47
              $region44: #{tpu_custom_call.1} parent=39 // loop_body
                %v270 = vld [vmem:[%s268] sm:%s261]
                %271 = vst [vmem:[%s269] sm:%s261] %v270
                %v272 = vld [vmem:[%s268 + $0x8] sm:%s261]
                %273 = vst [vmem:[%s269 + $0x4] sm:%s261] %v272
                %v274 = vld [vmem:[%s268 + $0x10] sm:%s261]
                %275 = vst [vmem:[%s269 + $0x8] sm:%s261] %v274
                %v276 = vld [vmem:[%s268 + $0x18] sm:%s261]
                %277 = vst [vmem:[%s269 + $0xc] sm:%s261] %v276
                %v278 = vld [vmem:[%s268 + $0x20] sm:%s261]
                %279 = vst [vmem:[%s269 + $0x10] sm:%s261] %v278
                %v280 = vld [vmem:[%s268 + $0x28] sm:%s261]
                %281 = vst [vmem:[%s269 + $0x14] sm:%s261] %v280
                %v282 = vld [vmem:[%s268 + $0x30] sm:%s261]
                %283 = vst [vmem:[%s269 + $0x18] sm:%s261] %v282
                %v284 = vld [vmem:[%s268 + $0x38] sm:%s261]
                %285 = vst [vmem:[%s269 + $0x1c] sm:%s261] %v284
                %v286 = vld [vmem:[%s268 + $0x40] sm:%s261]
                %287 = vst [vmem:[%s269 + $0x20] sm:%s261] %v286
                %v288 = vld [vmem:[%s268 + $0x48] sm:%s261]
                %289 = vst [vmem:[%s269 + $0x24] sm:%s261] %v288
                %v290 = vld [vmem:[%s268 + $0x50] sm:%s261]
                %291 = vst [vmem:[%s269 + $0x28] sm:%s261] %v290
                %v292 = vld [vmem:[%s268 + $0x58] sm:%s261]
                %293 = vst [vmem:[%s269 + $0x2c] sm:%s261] %v292
                %v294 = vld [vmem:[%s268 + $0x60] sm:%s261]
                %295 = vst [vmem:[%s269 + $0x30] sm:%s261] %v294
                %v296 = vld [vmem:[%s268 + $0x68] sm:%s261]
                %297 = vst [vmem:[%s269 + $0x34] sm:%s261] %v296
                %v298 = vld [vmem:[%s268 + $0x70] sm:%s261]
                %299 = vst [vmem:[%s269 + $0x38] sm:%s261] %v298
                %v300 = vld [vmem:[%s268 + $0x78] sm:%s261]
                %301 = vst [vmem:[%s269 + $0x3c] sm:%s261] %v300
              $region45: #{tpu_custom_call.1} parent=39 // loop_footer
                %s267 = sadd.s32 1, %s263
              $region46: #{tpu_custom_call.1} parent=39 // loop_footer_branch
                %262 = sbr.rel target = $region42
              $region47: #{tpu_custom_call.1} parent=39 // loop_exit
                _
            $region40: #{tpu_custom_call.1} parent=31 // pred_fallthru
              _
          $region32: #{tpu_custom_call.1} parent=27 // pred_fallthru
            _
          %354 = vnop
        $region28: #{tpu_custom_call.1} parent=23 // pred_fallthru
          _
        // Predicated region
        $region66: #{tpu_custom_call.1} parent=23 // pred_check
          %p355 = pneg %p81
        $region67: #{tpu_custom_call.1} parent=23 // pred_check_branch
          %357 = sbr.rel (%p355) target = $region69
        $region68: #{tpu_custom_call.1} parent=23 // pred_region
          %s358 = sand.u32 %s71, 1
          %s359 = scalar_lea.sflag [#allocation5], %s358
          %s360 = sand.u32 %s71, 1
          %s361 = smul.addr %s360, 64
          %s362 = scalar_lea.vmem [#allocation4], %s361
          %s363 = smul.u32 16, %s29
          %s365 = ssub.s32 1024, 1024
          %366 = vsyncadd %s359, %s365
          %s367 = smul.addr %s363, 64
          %s368 = scalar_lea.hbm %s1, %s367
          %s369 = sshll.u32 %s362, 4
          %s370 = int_to_ptr.vmem [resolvable:$true] %s369
          %375 = dma.hbm_to_vmem [thread:$0]  %s368, 1024, %s370, %s359, 64, 64, 4
        $region69: #{tpu_custom_call.1} parent=23 // pred_fallthru
          _
        // Predicated region
        $region70: #{tpu_custom_call.1} parent=23 // pred_check
          %p376 = pneg %p107
        $region71: #{tpu_custom_call.1} parent=23 // pred_check_branch
          %378 = sbr.rel (%p376) target = $region73
        $region72: #{tpu_custom_call.1} parent=23 // pred_region
          %s379 = sand.u32 %s21, 1
          %s380 = scalar_lea.sflag [#allocation8], %s379
          %s381 = sand.u32 %s97, 1
          %s382 = smul.addr %s381, 128
          %s383 = scalar_lea.vmem [#allocation7], %s382
          %s384 = smul.u32 16, %s28
          %s386 = ssub.s32 2048, 2048
          %387 = vsyncadd %s380, %s386
          %s388 = smul.addr %s384, 128
          %s389 = scalar_lea.hbm %s2, %s388
          %s390 = sshll.u32 %s383, 4
          %s391 = int_to_ptr.vmem [resolvable:$true] %s390
          %396 = dma.hbm_to_vmem [thread:$0]  %s389, 2048, %s391, %s380, 128, 128, 8
        $region73: #{tpu_custom_call.1} parent=23 // pred_fallthru
          _
        // Predicated region
        $region74: #{tpu_custom_call.1} parent=23 // pred_check
          %p397 = pneg %p133
        $region75: #{tpu_custom_call.1} parent=23 // pred_check_branch
          %399 = sbr.rel (%p397) target = $region77
        $region76: #{tpu_custom_call.1} parent=23 // pred_region
          %s400 = smul.u32 16, %s28
          %p401 = scmp.lt.s32.totalorder %s400, 31
          %s402 = scalar_select %p401, %s400, 31
          %s403 = smul.addr %s402, 8
          %s404 = scalar_lea.vmem %s3, %s403
          %s405 = smul.u32 16, %s28
        $region77: #{tpu_custom_call.1} parent=23 // pred_fallthru
          _
      $region24: #{tpu_custom_call.1} parent=5 // pred_fallthru
        _
      %p406 = scmp.le.s32.totalorder 1, %s21
      %p407 = scmp.lt.s32.totalorder %s21, 5
      %p408 = pnand %p406, %p407
      %p409 = pneg %p408
      // Predicated region
      $region78: #{tpu_custom_call.1} parent=5 // pred_check
        _
      $region79: #{tpu_custom_call.1} parent=5 // pred_check_branch
        %411 = sbr.rel (%p408) target = $region81
      $region80: #{tpu_custom_call.1} parent=5 // pred_region
        %s412 = ssub.s32 %s21, 1
        %s413 = sand.u32 %s48, 1
        %s414 = sand.u32 %s48, 1
        %s415 = smul.addr %s414, 64
        %s416 = scalar_lea.vmem [#allocation3], %s415
        // Predicated region
        $region82: #{tpu_custom_call.1} parent=80 // pred_check
          %p417 = pneg %p61
        $region83: #{tpu_custom_call.1} parent=80 // pred_check_branch
          %419 = sbr.rel (%p417) target = $region85
        $region84: #{tpu_custom_call.1} parent=80 // pred_region
          _
        $region85: #{tpu_custom_call.1} parent=80 // pred_fallthru
          _
        %s420 = sand.u32 %s74, 1
        %s421 = scalar_lea.sflag [#allocation5], %s420
        %s422 = sand.u32 %s74, 1
        %s423 = smul.addr %s422, 64
        %s424 = scalar_lea.vmem [#allocation4], %s423
        // Predicated region
        $region86: #{tpu_custom_call.1} parent=80 // pred_check
          %p425 = pneg %p87
        $region87: #{tpu_custom_call.1} parent=80 // pred_check_branch
          %427 = sbr.rel (%p425) target = $region89
        $region88: #{tpu_custom_call.1} parent=80 // pred_region
          %428 = dma.done %s421, 1024
        $region89: #{tpu_custom_call.1} parent=80 // pred_fallthru
          _
        %s429 = sand.u32 %s26, 1
        %s430 = scalar_lea.sflag [#allocation8], %s429
        %s431 = sand.u32 %s100, 1
        %s432 = smul.addr %s431, 128
        %s433 = scalar_lea.vmem [#allocation7], %s432
        // Predicated region
        $region90: #{tpu_custom_call.1} parent=80 // pred_check
          %p434 = pneg %p113
        $region91: #{tpu_custom_call.1} parent=80 // pred_check_branch
          %436 = sbr.rel (%p434) target = $region93
        $region92: #{tpu_custom_call.1} parent=80 // pred_region
          %437 = dma.done %s430, 2048
        $region93: #{tpu_custom_call.1} parent=80 // pred_fallthru
          _
        // Predicated region
        $region94: #{tpu_custom_call.1} parent=80 // pred_check
          %p438 = pneg %p160
        $region95: #{tpu_custom_call.1} parent=80 // pred_check_branch
          %440 = sbr.rel (%p438) target = $region97
        $region96: #{tpu_custom_call.1} parent=80 // pred_region
          %441 = dma.done [#allocation8], 2048
        $region97: #{tpu_custom_call.1} parent=80 // pred_fallthru
          _
        %s442 = sand.u32 %s48, 1
        %s443 = sand.u32 %s48, 1
        %s444 = smul.addr %s443, 64
        %s445 = scalar_lea.vmem [#allocation3], %s444
        %p446 = pneg %p61
        %p447 = pneg %p58
        %s448 = sand.u32 %s74, 1
        %s449 = scalar_lea.sflag [#allocation5], %s448
        %s450 = sand.u32 %s74, 1
        %s451 = smul.addr %s450, 64
        %s452 = scalar_lea.vmem [#allocation4], %s451
        %p453 = pneg %p87
        %p454 = pneg %p84
        %s455 = sand.u32 %s26, 1
        %s456 = scalar_lea.sflag [#allocation8], %s455
        %s457 = sand.u32 %s100, 1
        %s458 = smul.addr %s457, 128
        %s459 = scalar_lea.vmem [#allocation7], %s458
        %p460 = pneg %p113
        %p461 = pneg %p110
        %s462 = smul.u32 16, %s30
        %p463 = scmp.lt.s32.totalorder %s462, 31
        %s464 = scalar_select %p463, %s462, 31
        %s465 = smul.addr %s464, 8
        %s466 = scalar_lea.vmem %s3, %s465
        %p467 = pneg %p139
        %p468 = pneg %p136
        %p469 = pneg %p160
        %p470 = pneg %p157
        %p471 = pneg %p181
        %p472 = pneg %p178
        %p473 = pneg %p207
        %p474 = pneg %p204
        %s475 = sand.u32 %s194, 1
        %s476 = scalar_lea.sflag [#allocation6], %s475
        %s477 = sand.u32 %s194, 1
        %s478 = smul.addr %s477, 128
        %s479 = scalar_lea.vmem [#allocation10], %s478
        %s480 = smul.u32 16, %s30
        %s481 = smul.u32 16, %s31
        %s482 = smul.u32 16, %s30
        %s483 = smul.u32 16, %s30
        %p484 = scmp.lt.s32.totalorder %s483, 31
        %s485 = scalar_select %p484, %s483, 31
        %s486 = smul.addr %s485, 8
        %s487 = scalar_lea.vmem %s3, %s486
        %s488 = smul.u32 16, %s30
        %s489 = smul.u32 16, %s30
        %p491 = scmp.eq.s32.totalorder %s31, 0
        // Predicated region
        $region98: #{tpu_custom_call.1} parent=80 // pred_check
          %p492 = pneg %p491
        $region99: #{tpu_custom_call.1} parent=80 // pred_check_branch
          %494 = sbr.rel (%p492) target = $region101
        $region100: #{tpu_custom_call.1} parent=80 // pred_region
          %495 = vst [vmem:[#allocation2] sm:$0xff] 0.0
          %496 = vst [vmem:[#allocation2 + $0x8] sm:$0xff] 0.0
          %497 = vst [vmem:[#allocation2 + $0x10] sm:$0xff] 0.0
          %498 = vst [vmem:[#allocation2 + $0x18] sm:$0xff] 0.0
          %499 = vst [vmem:[#allocation2 + $0x20] sm:$0xff] 0.0
          %500 = vst [vmem:[#allocation2 + $0x28] sm:$0xff] 0.0
          %501 = vst [vmem:[#allocation2 + $0x30] sm:$0xff] 0.0
          %502 = vst [vmem:[#allocation2 + $0x38] sm:$0xff] 0.0
          %503 = vst [vmem:[#allocation2 + $0x40] sm:$0xff] 0.0
          %504 = vst [vmem:[#allocation2 + $0x48] sm:$0xff] 0.0
          %505 = vst [vmem:[#allocation2 + $0x50] sm:$0xff] 0.0
          %506 = vst [vmem:[#allocation2 + $0x58] sm:$0xff] 0.0
          %507 = vst [vmem:[#allocation2 + $0x60] sm:$0xff] 0.0
          %508 = vst [vmem:[#allocation2 + $0x68] sm:$0xff] 0.0
          %509 = vst [vmem:[#allocation2 + $0x70] sm:$0xff] 0.0
          %510 = vst [vmem:[#allocation2 + $0x78] sm:$0xff] 0.0
        $region101: #{tpu_custom_call.1} parent=80 // pred_fallthru
          _
        %v511 = vld [vmem:[#allocation2] sm:$0xff]
        %v512 = vld [vmem:[#allocation2 + $0x8] sm:$0xff]
        %v513 = vld [vmem:[#allocation2 + $0x10] sm:$0xff]
        %v514 = vld [vmem:[#allocation2 + $0x18] sm:$0xff]
        %v515 = vld [vmem:[#allocation2 + $0x20] sm:$0xff]
        %v516 = vld [vmem:[#allocation2 + $0x28] sm:$0xff]
        %v517 = vld [vmem:[#allocation2 + $0x30] sm:$0xff]
        %v518 = vld [vmem:[#allocation2 + $0x38] sm:$0xff]
        %v519 = vld [vmem:[#allocation2 + $0x40] sm:$0xff]
        %v520 = vld [vmem:[#allocation2 + $0x48] sm:$0xff]
        %v521 = vld [vmem:[#allocation2 + $0x50] sm:$0xff]
        %v522 = vld [vmem:[#allocation2 + $0x58] sm:$0xff]
        %v523 = vld [vmem:[#allocation2 + $0x60] sm:$0xff]
        %v524 = vld [vmem:[#allocation2 + $0x68] sm:$0xff]
        %v525 = vld [vmem:[#allocation2 + $0x70] sm:$0xff]
        %v526 = vld [vmem:[#allocation2 + $0x78] sm:$0xff]
        %v527 = vld [vmem:[%s416] sm:$0xf]
        %v528 = vld [vmem:[%s416 + $0x4] sm:$0xf]
        %v529 = vld [vmem:[%s416 + $0x8] sm:$0xf]
        %v530 = vld [vmem:[%s416 + $0xc] sm:$0xf]
        %v531 = vld [vmem:[%s416 + $0x10] sm:$0xf]
        %v532 = vld [vmem:[%s416 + $0x14] sm:$0xf]
        %v533 = vld [vmem:[%s416 + $0x18] sm:$0xf]
        %v534 = vld [vmem:[%s416 + $0x1c] sm:$0xf]
        %v535 = vld [vmem:[%s416 + $0x20] sm:$0xf]
        %v536 = vld [vmem:[%s416 + $0x24] sm:$0xf]
        %v537 = vld [vmem:[%s416 + $0x28] sm:$0xf]
        %v538 = vld [vmem:[%s416 + $0x2c] sm:$0xf]
        %v539 = vld [vmem:[%s416 + $0x30] sm:$0xf]
        %v540 = vld [vmem:[%s416 + $0x34] sm:$0xf]
        %v541 = vld [vmem:[%s416 + $0x38] sm:$0xf]
        %v542 = vld [vmem:[%s416 + $0x3c] sm:$0xf]
        %v543 = vld [vmem:[%s424] sm:$0xf]
        %v544 = vld [vmem:[%s424 + $0x4] sm:$0xf]
        %v545 = vld [vmem:[%s424 + $0x8] sm:$0xf]
        %v546 = vld [vmem:[%s424 + $0xc] sm:$0xf]
        %v547 = vld [vmem:[%s424 + $0x10] sm:$0xf]
        %v548 = vld [vmem:[%s424 + $0x14] sm:$0xf]
        %v549 = vld [vmem:[%s424 + $0x18] sm:$0xf]
        %v550 = vld [vmem:[%s424 + $0x1c] sm:$0xf]
        %v551 = vld [vmem:[%s424 + $0x20] sm:$0xf]
        %v552 = vld [vmem:[%s424 + $0x24] sm:$0xf]
        %v553 = vld [vmem:[%s424 + $0x28] sm:$0xf]
        %v554 = vld [vmem:[%s424 + $0x2c] sm:$0xf]
        %v555 = vld [vmem:[%s424 + $0x30] sm:$0xf]
        %v556 = vld [vmem:[%s424 + $0x34] sm:$0xf]
        %v557 = vld [vmem:[%s424 + $0x38] sm:$0xf]
        %v558 = vld [vmem:[%s424 + $0x3c] sm:$0xf]
        %v575 = vunpack.c.l.b16 %v527
        %v576 = vunpack.c.l.b16 %v528
        %v577 = vunpack.c.l.b16 %v529
        %v578 = vunpack.c.l.b16 %v530
        %v579 = vunpack.c.l.b16 %v531
        %v580 = vunpack.c.l.b16 %v532
        %v581 = vunpack.c.l.b16 %v533
        %v582 = vunpack.c.l.b16 %v534
        %v583 = vunpack.c.l.b16 %v535
        %v584 = vunpack.c.l.b16 %v536
        %v585 = vunpack.c.l.b16 %v537
        %v586 = vunpack.c.l.b16 %v538
        %v587 = vunpack.c.l.b16 %v539
        %v588 = vunpack.c.l.b16 %v540
        %v589 = vunpack.c.l.b16 %v541
        %v590 = vunpack.c.l.b16 %v542
        %v591 = vpack.c.b16 %v576, %v575
        %v592 = vpack.c.b16 %v578, %v577
        %v593 = vpack.c.b16 %v580, %v579
        %v594 = vpack.c.b16 %v582, %v581
        %v595 = vpack.c.b16 %v584, %v583
        %v596 = vpack.c.b16 %v586, %v585
        %v597 = vpack.c.b16 %v588, %v587
        %v598 = vpack.c.b16 %v590, %v589
        %v623 = vunpack.c.l.b16 %v543
        %v624 = vunpack.c.l.b16 %v544
        %v625 = vunpack.c.l.b16 %v545
        %v626 = vunpack.c.l.b16 %v546
        %v627 = vunpack.c.l.b16 %v547
        %v628 = vunpack.c.l.b16 %v548
        %v629 = vunpack.c.l.b16 %v549
        %v630 = vunpack.c.l.b16 %v550
        %v631 = vunpack.c.l.b16 %v551
        %v632 = vunpack.c.l.b16 %v552
        %v633 = vunpack.c.l.b16 %v553
        %v634 = vunpack.c.l.b16 %v554
        %v635 = vunpack.c.l.b16 %v555
        %v636 = vunpack.c.l.b16 %v556
        %v637 = vunpack.c.l.b16 %v557
        %v638 = vunpack.c.l.b16 %v558
        %v639 = vpack.c.b16 %v624, %v623
        %v640 = vpack.c.b16 %v626, %v625
        %v641 = vpack.c.b16 %v628, %v627
        %v642 = vpack.c.b16 %v630, %v629
        %v643 = vpack.c.b16 %v632, %v631
        %v644 = vpack.c.b16 %v634, %v633
        %v645 = vpack.c.b16 %v636, %v635
        %v646 = vpack.c.b16 %v638, %v637
        %655 = vmatprep.subr.bf16.mxu0 0
        %656 = vmatpush1.bf16.msra.mxu0 %v646
        %657 = vmatprep.subr.bf16.mxu0 0
        %658 = vmatpush1.bf16.msra.mxu0 %v645
        %659 = vmatprep.subr.bf16.mxu0 0
        %660 = vmatpush1.bf16.msra.mxu0 %v644
        %661 = vmatprep.subr.bf16.mxu0 0
        %662 = vmatpush1.bf16.msra.mxu0 %v643
        %663 = vmatprep.subr.bf16.mxu0 0
        %664 = vmatpush1.bf16.msra.mxu0 %v642
        %665 = vmatprep.subr.bf16.mxu0 0
        %666 = vmatpush1.bf16.msra.mxu0 %v641
        %667 = vmatprep.subr.bf16.mxu0 0
        %668 = vmatpush1.bf16.msra.mxu0 %v640
        %669 = vmatprep.subr.bf16.mxu0 0
        %670 = vmatpush1.bf16.msra.mxu0 %v639
        %671 = vmatprep.subr.bf16.mxu0 0
        %672 = vmatpush2.bf16.msra.mxu0 0
        %673 = vmatprep.subr.bf16.mxu0 0
        %674 = vmatpush2.bf16.msra.mxu0 0
        %675 = vmatprep.subr.bf16.mxu0 0
        %676 = vmatpush2.bf16.msra.mxu0 0
        %677 = vmatprep.subr.bf16.mxu0 0
        %678 = vmatpush2.bf16.msra.mxu0 0
        %679 = vmatprep.subr.bf16.mxu0 0
        %680 = vmatpush2.bf16.msra.mxu0 0
        %681 = vmatprep.subr.bf16.mxu0 0
        %682 = vmatpush2.bf16.msra.mxu0 0
        %683 = vmatprep.subr.bf16.mxu0 0
        %684 = vmatpush2.bf16.msra.mxu0 0
        %685 = vmatprep.subr.bf16.mxu0 0
        %686 = vmatpush2.bf16.msra.mxu0 0
        %687 = vmatprep.mubr.bf16.mxu0 0
        %688 = vmatmul.mubr.bf16.gmra.mxu0 %v591
        %v689 = vpop.f32.mrf.mxu0
        %v690 = vadd.f32 0.0, %v689
        %v691 = vpop.f32.mrf.mxu0
        %v692 = vpop.f32.mrf.mxu0
        %v693 = vadd.f32 0.0, %v692
        %v694 = vpop.f32.mrf.mxu0
        %695 = vmatprep.mubr.bf16.mxu0 0
        %696 = vmatmul.mubr.bf16.gmra.mxu0 %v592
        %v697 = vpop.f32.mrf.mxu0
        %v698 = vadd.f32 0.0, %v697
        %v699 = vpop.f32.mrf.mxu0
        %v700 = vpop.f32.mrf.mxu0
        %v701 = vadd.f32 0.0, %v700
        %v702 = vpop.f32.mrf.mxu0
        %703 = vmatprep.mubr.bf16.mxu0 0
        %704 = vmatmul.mubr.bf16.gmra.mxu0 %v593
        %v705 = vpop.f32.mrf.mxu0
        %v706 = vadd.f32 0.0, %v705
        %v707 = vpop.f32.mrf.mxu0
        %v708 = vpop.f32.mrf.mxu0
        %v709 = vadd.f32 0.0, %v708
        %v710 = vpop.f32.mrf.mxu0
        %711 = vmatprep.mubr.bf16.mxu0 0
        %712 = vmatmul.mubr.bf16.gmra.mxu0 %v594
        %v713 = vpop.f32.mrf.mxu0
        %v714 = vadd.f32 0.0, %v713
        %v715 = vpop.f32.mrf.mxu0
        %v716 = vpop.f32.mrf.mxu0
        %v717 = vadd.f32 0.0, %v716
        %v718 = vpop.f32.mrf.mxu0
        %719 = vmatprep.mubr.bf16.mxu0 0
        %720 = vmatmul.mubr.bf16.gmra.mxu0 %v595
        %v721 = vpop.f32.mrf.mxu0
        %v722 = vadd.f32 0.0, %v721
        %v723 = vpop.f32.mrf.mxu0
        %v724 = vpop.f32.mrf.mxu0
        %v725 = vadd.f32 0.0, %v724
        %v726 = vpop.f32.mrf.mxu0
        %727 = vmatprep.mubr.bf16.mxu0 0
        %728 = vmatmul.mubr.bf16.gmra.mxu0 %v596
        %v729 = vpop.f32.mrf.mxu0
        %v730 = vadd.f32 0.0, %v729
        %v731 = vpop.f32.mrf.mxu0
        %v732 = vpop.f32.mrf.mxu0
        %v733 = vadd.f32 0.0, %v732
        %v734 = vpop.f32.mrf.mxu0
        %735 = vmatprep.mubr.bf16.mxu0 0
        %736 = vmatmul.mubr.bf16.gmra.mxu0 %v597
        %v737 = vpop.f32.mrf.mxu0
        %v738 = vadd.f32 0.0, %v737
        %v739 = vpop.f32.mrf.mxu0
        %v740 = vpop.f32.mrf.mxu0
        %v741 = vadd.f32 0.0, %v740
        %v742 = vpop.f32.mrf.mxu0
        %743 = vmatprep.mubr.bf16.mxu0 0
        %744 = vmatmul.mubr.bf16.gmra.mxu0 %v598
        %v745 = vpop.f32.mrf.mxu0
        %v746 = vadd.f32 0.0, %v745
        %v747 = vpop.f32.mrf.mxu0
        %v748 = vpop.f32.mrf.mxu0
        %v749 = vadd.f32 0.0, %v748
        %v750 = vpop.f32.mrf.mxu0
        %751 = vdwg.mxu0
        %v752 = vadd.f32 %v511, %v690
        %v753 = vadd.f32 %v512, %v693
        %v754 = vadd.f32 %v513, %v698
        %v755 = vadd.f32 %v514, %v701
        %v756 = vadd.f32 %v515, %v706
        %v757 = vadd.f32 %v516, %v709
        %v758 = vadd.f32 %v517, %v714
        %v759 = vadd.f32 %v518, %v717
        %v760 = vadd.f32 %v519, %v722
        %v761 = vadd.f32 %v520, %v725
        %v762 = vadd.f32 %v521, %v730
        %v763 = vadd.f32 %v522, %v733
        %v764 = vadd.f32 %v523, %v738
        %v765 = vadd.f32 %v524, %v741
        %v766 = vadd.f32 %v525, %v746
        %v767 = vadd.f32 %v526, %v749
        %768 = vst [vmem:[#allocation2] sm:$0xff] %v752
        %769 = vst [vmem:[#allocation2 + $0x8] sm:$0xff] %v753
        %770 = vst [vmem:[#allocation2 + $0x10] sm:$0xff] %v754
        %771 = vst [vmem:[#allocation2 + $0x18] sm:$0xff] %v755
        %772 = vst [vmem:[#allocation2 + $0x20] sm:$0xff] %v756
        %773 = vst [vmem:[#allocation2 + $0x28] sm:$0xff] %v757
        %774 = vst [vmem:[#allocation2 + $0x30] sm:$0xff] %v758
        %775 = vst [vmem:[#allocation2 + $0x38] sm:$0xff] %v759
        %776 = vst [vmem:[#allocation2 + $0x40] sm:$0xff] %v760
        %777 = vst [vmem:[#allocation2 + $0x48] sm:$0xff] %v761
        %778 = vst [vmem:[#allocation2 + $0x50] sm:$0xff] %v762
        %779 = vst [vmem:[#allocation2 + $0x58] sm:$0xff] %v763
        %780 = vst [vmem:[#allocation2 + $0x60] sm:$0xff] %v764
        %781 = vst [vmem:[#allocation2 + $0x68] sm:$0xff] %v765
        %782 = vst [vmem:[#allocation2 + $0x70] sm:$0xff] %v766
        %783 = vst [vmem:[#allocation2 + $0x78] sm:$0xff] %v767
        %p784 = scmp.eq.s32.totalorder %s31, 1
        // Predicated region
        $region102: #{tpu_custom_call.1} parent=80 // pred_check
          %p785 = pneg %p784
        $region103: #{tpu_custom_call.1} parent=80 // pred_check_branch
          %787 = sbr.rel (%p785) target = $region105
        $region104: #{tpu_custom_call.1} parent=80 // pred_region
          %v788 = vld [vmem:[%s433] sm:$0xff]
          %v789 = vld [vmem:[%s433 + $0x8] sm:$0xff]
          %v790 = vld [vmem:[%s433 + $0x10] sm:$0xff]
          %v791 = vld [vmem:[%s433 + $0x18] sm:$0xff]
          %v792 = vld [vmem:[%s433 + $0x20] sm:$0xff]
          %v793 = vld [vmem:[%s433 + $0x28] sm:$0xff]
          %v794 = vld [vmem:[%s433 + $0x30] sm:$0xff]
          %v795 = vld [vmem:[%s433 + $0x38] sm:$0xff]
          %v796 = vld [vmem:[%s433 + $0x40] sm:$0xff]
          %v797 = vld [vmem:[%s433 + $0x48] sm:$0xff]
          %v798 = vld [vmem:[%s433 + $0x50] sm:$0xff]
          %v799 = vld [vmem:[%s433 + $0x58] sm:$0xff]
          %v800 = vld [vmem:[%s433 + $0x60] sm:$0xff]
          %v801 = vld [vmem:[%s433 + $0x68] sm:$0xff]
          %v802 = vld [vmem:[%s433 + $0x70] sm:$0xff]
          %v803 = vld [vmem:[%s433 + $0x78] sm:$0xff]
          %v804 = vld [vmem:[#allocation2] sm:$0xff]
          %v805 = vld [vmem:[#allocation2 + $0x8] sm:$0xff]
          %v806 = vld [vmem:[#allocation2 + $0x10] sm:$0xff]
          %v807 = vld [vmem:[#allocation2 + $0x18] sm:$0xff]
          %v808 = vld [vmem:[#allocation2 + $0x20] sm:$0xff]
          %v809 = vld [vmem:[#allocation2 + $0x28] sm:$0xff]
          %v810 = vld [vmem:[#allocation2 + $0x30] sm:$0xff]
          %v811 = vld [vmem:[#allocation2 + $0x38] sm:$0xff]
          %v812 = vld [vmem:[#allocation2 + $0x40] sm:$0xff]
          %v813 = vld [vmem:[#allocation2 + $0x48] sm:$0xff]
          %v814 = vld [vmem:[#allocation2 + $0x50] sm:$0xff]
          %v815 = vld [vmem:[#allocation2 + $0x58] sm:$0xff]
          %v816 = vld [vmem:[#allocation2 + $0x60] sm:$0xff]
          %v817 = vld [vmem:[#allocation2 + $0x68] sm:$0xff]
          %v818 = vld [vmem:[#allocation2 + $0x70] sm:$0xff]
          %v819 = vld [vmem:[#allocation2 + $0x78] sm:$0xff]
          %v820 = vld [vmem:[%s487] sm:$0xff]
          %v821 = vld [vmem:[%s487 + $0x8] sm:$0xff]
          %v822 = vld [vmem:[%s487 + $0x10] sm:$0xff]
          %v823 = vld [vmem:[%s487 + $0x18] sm:$0xff]
          %v824 = vld [vmem:[%s487 + $0x20] sm:$0xff]
          %v825 = vld [vmem:[%s487 + $0x28] sm:$0xff]
          %v826 = vld [vmem:[%s487 + $0x30] sm:$0xff]
          %v827 = vld [vmem:[%s487 + $0x38] sm:$0xff]
          %v828 = vld [vmem:[%s487 + $0x40] sm:$0xff]
          %v829 = vld [vmem:[%s487 + $0x48] sm:$0xff]
          %v830 = vld [vmem:[%s487 + $0x50] sm:$0xff]
          %v831 = vld [vmem:[%s487 + $0x58] sm:$0xff]
          %v832 = vld [vmem:[%s487 + $0x60] sm:$0xff]
          %v833 = vld [vmem:[%s487 + $0x68] sm:$0xff]
          %v834 = vld [vmem:[%s487 + $0x70] sm:$0xff]
          %v835 = vld [vmem:[%s487 + $0x78] sm:$0xff]
          %837 = vset.pattern.permute.xlu0 0
          %838 = vperm.xlu0 %837, %v820
          %v839 = vpop.permute.xlu0 %838
          %842 = vset.pattern.permute.xlu0 0
          %843 = vperm.xlu0 %842, %v821
          %v844 = vpop.permute.xlu0 %843
          %847 = vset.pattern.permute.xlu0 0
          %848 = vperm.xlu0 %847, %v822
          %v849 = vpop.permute.xlu0 %848
          %852 = vset.pattern.permute.xlu0 0
          %853 = vperm.xlu0 %852, %v823
          %v854 = vpop.permute.xlu0 %853
          %857 = vset.pattern.permute.xlu0 0
          %858 = vperm.xlu0 %857, %v824
          %v859 = vpop.permute.xlu0 %858
          %862 = vset.pattern.permute.xlu0 0
          %863 = vperm.xlu0 %862, %v825
          %v864 = vpop.permute.xlu0 %863
          %867 = vset.pattern.permute.xlu0 0
          %868 = vperm.xlu0 %867, %v826
          %v869 = vpop.permute.xlu0 %868
          %872 = vset.pattern.permute.xlu0 0
          %873 = vperm.xlu0 %872, %v827
          %v874 = vpop.permute.xlu0 %873
          %877 = vset.pattern.permute.xlu0 0
          %878 = vperm.xlu0 %877, %v828
          %v879 = vpop.permute.xlu0 %878
          %882 = vset.pattern.permute.xlu0 0
          %883 = vperm.xlu0 %882, %v829
          %v884 = vpop.permute.xlu0 %883
          %887 = vset.pattern.permute.xlu0 0
          %888 = vperm.xlu0 %887, %v830
          %v889 = vpop.permute.xlu0 %888
          %892 = vset.pattern.permute.xlu0 0
          %893 = vperm.xlu0 %892, %v831
          %v894 = vpop.permute.xlu0 %893
          %897 = vset.pattern.permute.xlu0 0
          %898 = vperm.xlu0 %897, %v832
          %v899 = vpop.permute.xlu0 %898
          %902 = vset.pattern.permute.xlu0 0
          %903 = vperm.xlu0 %902, %v833
          %v904 = vpop.permute.xlu0 %903
          %907 = vset.pattern.permute.xlu0 0
          %908 = vperm.xlu0 %907, %v834
          %v909 = vpop.permute.xlu0 %908
          %912 = vset.pattern.permute.xlu0 0
          %913 = vperm.xlu0 %912, %v835
          %v914 = vpop.permute.xlu0 %913
          %v916 = vmul.f32 %v804, %v839
          %v917 = vmul.f32 %v805, %v844
          %v918 = vmul.f32 %v806, %v849
          %v919 = vmul.f32 %v807, %v854
          %v920 = vmul.f32 %v808, %v859
          %v921 = vmul.f32 %v809, %v864
          %v922 = vmul.f32 %v810, %v869
          %v923 = vmul.f32 %v811, %v874
          %v924 = vmul.f32 %v812, %v879
          %v925 = vmul.f32 %v813, %v884
          %v926 = vmul.f32 %v814, %v889
          %v927 = vmul.f32 %v815, %v894
          %v928 = vmul.f32 %v816, %v899
          %v929 = vmul.f32 %v817, %v904
          %v930 = vmul.f32 %v818, %v909
          %v931 = vmul.f32 %v819, %v914
          %v932 = vpack.c.bf16 %v917, %v916
          %v933 = vpack.c.bf16 %v919, %v918
          %v934 = vpack.c.bf16 %v921, %v920
          %v935 = vpack.c.bf16 %v923, %v922
          %v936 = vpack.c.bf16 %v925, %v924
          %v937 = vpack.c.bf16 %v927, %v926
          %v938 = vpack.c.bf16 %v929, %v928
          %v939 = vpack.c.bf16 %v931, %v930
          %v940 = vpack.c.bf16 %v789, %v788
          %v941 = vpack.c.bf16 %v791, %v790
          %v942 = vpack.c.bf16 %v793, %v792
          %v943 = vpack.c.bf16 %v795, %v794
          %v944 = vpack.c.bf16 %v797, %v796
          %v945 = vpack.c.bf16 %v799, %v798
          %v946 = vpack.c.bf16 %v801, %v800
          %v947 = vpack.c.bf16 %v803, %v802
          %v948 = vld [vmem:[#allocation9] sm:$0xf]
          %v949 = vld [vmem:[#allocation9 + $0x4] sm:$0xf]
          %v950 = vld [vmem:[#allocation9 + $0x8] sm:$0xf]
          %v951 = vld [vmem:[#allocation9 + $0xc] sm:$0xf]
          %v952 = vld [vmem:[#allocation9 + $0x10] sm:$0xf]
          %v953 = vld [vmem:[#allocation9 + $0x14] sm:$0xf]
          %v954 = vld [vmem:[#allocation9 + $0x18] sm:$0xf]
          %v955 = vld [vmem:[#allocation9 + $0x1c] sm:$0xf]
          %v956 = vld [vmem:[#allocation9 + $0x20] sm:$0xf]
          %v957 = vld [vmem:[#allocation9 + $0x24] sm:$0xf]
          %v958 = vld [vmem:[#allocation9 + $0x28] sm:$0xf]
          %v959 = vld [vmem:[#allocation9 + $0x2c] sm:$0xf]
          %v960 = vld [vmem:[#allocation9 + $0x30] sm:$0xf]
          %v961 = vld [vmem:[#allocation9 + $0x34] sm:$0xf]
          %v962 = vld [vmem:[#allocation9 + $0x38] sm:$0xf]
          %v963 = vld [vmem:[#allocation9 + $0x3c] sm:$0xf]
          %v964 = vld [vmem:[#allocation9 + $0x40] sm:$0xf]
          %v965 = vld [vmem:[#allocation9 + $0x44] sm:$0xf]
          %v966 = vld [vmem:[#allocation9 + $0x48] sm:$0xf]
          %v967 = vld [vmem:[#allocation9 + $0x4c] sm:$0xf]
          %v968 = vld [vmem:[#allocation9 + $0x50] sm:$0xf]
          %v969 = vld [vmem:[#allocation9 + $0x54] sm:$0xf]
          %v970 = vld [vmem:[#allocation9 + $0x58] sm:$0xf]
          %v971 = vld [vmem:[#allocation9 + $0x5c] sm:$0xf]
          %v972 = vld [vmem:[#allocation9 + $0x60] sm:$0xf]
          %v973 = vld [vmem:[#allocation9 + $0x64] sm:$0xf]
          %v974 = vld [vmem:[#allocation9 + $0x68] sm:$0xf]
          %v975 = vld [vmem:[#allocation9 + $0x6c] sm:$0xf]
          %v976 = vld [vmem:[#allocation9 + $0x70] sm:$0xf]
          %v977 = vld [vmem:[#allocation9 + $0x74] sm:$0xf]
          %v978 = vld [vmem:[#allocation9 + $0x78] sm:$0xf]
          %v979 = vld [vmem:[#allocation9 + $0x7c] sm:$0xf]
          %v980 = vld [vmem:[%s5] sm:$0x1]
          %v982 = vlaneseq
          %v983 = vshrl.u32 %v982, 7
          %v984 = vsub.s32 0, %v983
          %v985 = vrot.slane %v980, %v984
          %v1019 = vunpack.c.l.b16 %v948
          %v1020 = vunpack.c.l.b16 %v949
          %v1021 = vunpack.c.l.b16 %v950
          %v1022 = vunpack.c.l.b16 %v951
          %v1023 = vunpack.c.l.b16 %v952
          %v1024 = vunpack.c.l.b16 %v953
          %v1025 = vunpack.c.l.b16 %v954
          %v1026 = vunpack.c.l.b16 %v955
          %v1027 = vunpack.c.l.b16 %v956
          %v1028 = vunpack.c.l.b16 %v957
          %v1029 = vunpack.c.l.b16 %v958
          %v1030 = vunpack.c.l.b16 %v959
          %v1031 = vunpack.c.l.b16 %v960
          %v1032 = vunpack.c.l.b16 %v961
          %v1033 = vunpack.c.l.b16 %v962
          %v1034 = vunpack.c.l.b16 %v963
          %v1035 = vunpack.c.l.b16 %v964
          %v1036 = vunpack.c.l.b16 %v965
          %v1037 = vunpack.c.l.b16 %v966
          %v1038 = vunpack.c.l.b16 %v967
          %v1039 = vunpack.c.l.b16 %v968
          %v1040 = vunpack.c.l.b16 %v969
          %v1041 = vunpack.c.l.b16 %v970
          %v1042 = vunpack.c.l.b16 %v971
          %v1043 = vunpack.c.l.b16 %v972
          %v1044 = vunpack.c.l.b16 %v973
          %v1045 = vunpack.c.l.b16 %v974
          %v1046 = vunpack.c.l.b16 %v975
          %v1047 = vunpack.c.l.b16 %v976
          %v1048 = vunpack.c.l.b16 %v977
          %v1049 = vunpack.c.l.b16 %v978
          %v1050 = vunpack.c.l.b16 %v979
          %v1051 = vpack.c.b16 %v1020, %v1019
          %v1052 = vpack.c.b16 %v1022, %v1021
          %v1053 = vpack.c.b16 %v1024, %v1023
          %v1054 = vpack.c.b16 %v1026, %v1025
          %v1055 = vpack.c.b16 %v1028, %v1027
          %v1056 = vpack.c.b16 %v1030, %v1029
          %v1057 = vpack.c.b16 %v1032, %v1031
          %v1058 = vpack.c.b16 %v1034, %v1033
          %v1059 = vpack.c.b16 %v1036, %v1035
          %v1060 = vpack.c.b16 %v1038, %v1037
          %v1061 = vpack.c.b16 %v1040, %v1039
          %v1062 = vpack.c.b16 %v1042, %v1041
          %v1063 = vpack.c.b16 %v1044, %v1043
          %v1064 = vpack.c.b16 %v1046, %v1045
          %v1065 = vpack.c.b16 %v1048, %v1047
          %v1066 = vpack.c.b16 %v1050, %v1049
          %1083 = vmatprep.subr.bf16.mxu0 0
          %1084 = vmatpush1.bf16.msra.mxu0 %v1058
          %1085 = vmatprep.subr.bf16.mxu0 0
          %1086 = vmatpush1.bf16.msra.mxu0 %v1057
          %1087 = vmatprep.subr.bf16.mxu0 0
          %1088 = vmatpush1.bf16.msra.mxu0 %v1056
          %1089 = vmatprep.subr.bf16.mxu0 0
          %1090 = vmatpush1.bf16.msra.mxu0 %v1055
          %1091 = vmatprep.subr.bf16.mxu0 0
          %1092 = vmatpush1.bf16.msra.mxu0 %v1054
          %1093 = vmatprep.subr.bf16.mxu0 0
          %1094 = vmatpush1.bf16.msra.mxu0 %v1053
          %1095 = vmatprep.subr.bf16.mxu0 0
          %1096 = vmatpush1.bf16.msra.mxu0 %v1052
          %1097 = vmatprep.subr.bf16.mxu0 0
          %1098 = vmatpush1.bf16.msra.mxu0 %v1051
          %1099 = vmatprep.subr.bf16.mxu0 0
          %1100 = vmatpush2.bf16.msra.mxu0 %v1066
          %1101 = vmatprep.subr.bf16.mxu0 0
          %1102 = vmatpush2.bf16.msra.mxu0 %v1065
          %1103 = vmatprep.subr.bf16.mxu0 0
          %1104 = vmatpush2.bf16.msra.mxu0 %v1064
          %1105 = vmatprep.subr.bf16.mxu0 0
          %1106 = vmatpush2.bf16.msra.mxu0 %v1063
          %1107 = vmatprep.subr.bf16.mxu0 0
          %1108 = vmatpush2.bf16.msra.mxu0 %v1062
          %1109 = vmatprep.subr.bf16.mxu0 0
          %1110 = vmatpush2.bf16.msra.mxu0 %v1061
          %1111 = vmatprep.subr.bf16.mxu0 0
          %1112 = vmatpush2.bf16.msra.mxu0 %v1060
          %1113 = vmatprep.subr.bf16.mxu0 0
          %1114 = vmatpush2.bf16.msra.mxu0 %v1059
          %1115 = vmatprep.mubr.bf16.mxu0 %v940
          %1116 = vmatmul.mubr.bf16.gmra.mxu0 %v932
          %v1117 = vpop.f32.mrf.mxu0
          %v1118 = vadd.f32 %v985, %v1117
          %v1119 = vpop.f32.mrf.mxu0
          %v1120 = vpop.f32.mrf.mxu0
          %v1121 = vadd.f32 %v985, %v1120
          %v1122 = vpop.f32.mrf.mxu0
          %1123 = vmatprep.mubr.bf16.mxu0 %v941
          %1124 = vmatmul.mubr.bf16.gmra.mxu0 %v933
          %v1125 = vpop.f32.mrf.mxu0
          %v1126 = vadd.f32 %v985, %v1125
          %v1127 = vpop.f32.mrf.mxu0
          %v1128 = vpop.f32.mrf.mxu0
          %v1129 = vadd.f32 %v985, %v1128
          %v1130 = vpop.f32.mrf.mxu0
          %1131 = vmatprep.mubr.bf16.mxu0 %v942
          %1132 = vmatmul.mubr.bf16.gmra.mxu0 %v934
          %v1133 = vpop.f32.mrf.mxu0
          %v1134 = vadd.f32 %v985, %v1133
          %v1135 = vpop.f32.mrf.mxu0
          %v1136 = vpop.f32.mrf.mxu0
          %v1137 = vadd.f32 %v985, %v1136
          %v1138 = vpop.f32.mrf.mxu0
          %1139 = vmatprep.mubr.bf16.mxu0 %v943
          %1140 = vmatmul.mubr.bf16.gmra.mxu0 %v935
          %v1141 = vpop.f32.mrf.mxu0
          %v1142 = vadd.f32 %v985, %v1141
          %v1143 = vpop.f32.mrf.mxu0
          %v1144 = vpop.f32.mrf.mxu0
          %v1145 = vadd.f32 %v985, %v1144
          %v1146 = vpop.f32.mrf.mxu0
          %1147 = vmatprep.mubr.bf16.mxu0 %v944
          %1148 = vmatmul.mubr.bf16.gmra.mxu0 %v936
          %v1149 = vpop.f32.mrf.mxu0
          %v1150 = vadd.f32 %v985, %v1149
          %v1151 = vpop.f32.mrf.mxu0
          %v1152 = vpop.f32.mrf.mxu0
          %v1153 = vadd.f32 %v985, %v1152
          %v1154 = vpop.f32.mrf.mxu0
          %1155 = vmatprep.mubr.bf16.mxu0 %v945
          %1156 = vmatmul.mubr.bf16.gmra.mxu0 %v937
          %v1157 = vpop.f32.mrf.mxu0
          %v1158 = vadd.f32 %v985, %v1157
          %v1159 = vpop.f32.mrf.mxu0
          %v1160 = vpop.f32.mrf.mxu0
          %v1161 = vadd.f32 %v985, %v1160
          %v1162 = vpop.f32.mrf.mxu0
          %1163 = vmatprep.mubr.bf16.mxu0 %v946
          %1164 = vmatmul.mubr.bf16.gmra.mxu0 %v938
          %v1165 = vpop.f32.mrf.mxu0
          %v1166 = vadd.f32 %v985, %v1165
          %v1167 = vpop.f32.mrf.mxu0
          %v1168 = vpop.f32.mrf.mxu0
          %v1169 = vadd.f32 %v985, %v1168
          %v1170 = vpop.f32.mrf.mxu0
          %1171 = vmatprep.mubr.bf16.mxu0 %v947
          %1172 = vmatmul.mubr.bf16.gmra.mxu0 %v939
          %v1173 = vpop.f32.mrf.mxu0
          %v1174 = vadd.f32 %v985, %v1173
          %v1175 = vpop.f32.mrf.mxu0
          %v1176 = vpop.f32.mrf.mxu0
          %v1177 = vadd.f32 %v985, %v1176
          %v1178 = vpop.f32.mrf.mxu0
          %1179 = vdwg.mxu0
          %v1180 = vmul.f32 %v1118, %v1118
          %v1181 = vmul.f32 %v1121, %v1121
          %v1182 = vmul.f32 %v1126, %v1126
          %v1183 = vmul.f32 %v1129, %v1129
          %v1184 = vmul.f32 %v1134, %v1134
          %v1185 = vmul.f32 %v1137, %v1137
          %v1186 = vmul.f32 %v1142, %v1142
          %v1187 = vmul.f32 %v1145, %v1145
          %v1188 = vmul.f32 %v1150, %v1150
          %v1189 = vmul.f32 %v1153, %v1153
          %v1190 = vmul.f32 %v1158, %v1158
          %v1191 = vmul.f32 %v1161, %v1161
          %v1192 = vmul.f32 %v1166, %v1166
          %v1193 = vmul.f32 %v1169, %v1169
          %v1194 = vmul.f32 %v1174, %v1174
          %v1195 = vmul.f32 %v1177, %v1177
          %1196 = vadd.xlane.f32.xlu0 %v1180
          %v1197 = vpop.xlane.xlu0 %1196
          %1198 = vadd.xlane.f32.xlu0 %v1181
          %v1199 = vpop.xlane.xlu0 %1198
          %1200 = vadd.xlane.f32.xlu0 %v1182
          %v1201 = vpop.xlane.xlu0 %1200
          %1202 = vadd.xlane.f32.xlu0 %v1183
          %v1203 = vpop.xlane.xlu0 %1202
          %1204 = vadd.xlane.f32.xlu0 %v1184
          %v1205 = vpop.xlane.xlu0 %1204
          %1206 = vadd.xlane.f32.xlu0 %v1185
          %v1207 = vpop.xlane.xlu0 %1206
          %1208 = vadd.xlane.f32.xlu0 %v1186
          %v1209 = vpop.xlane.xlu0 %1208
          %1210 = vadd.xlane.f32.xlu0 %v1187
          %v1211 = vpop.xlane.xlu0 %1210
          %1212 = vadd.xlane.f32.xlu0 %v1188
          %v1213 = vpop.xlane.xlu0 %1212
          %1214 = vadd.xlane.f32.xlu0 %v1189
          %v1215 = vpop.xlane.xlu0 %1214
          %1216 = vadd.xlane.f32.xlu0 %v1190
          %v1217 = vpop.xlane.xlu0 %1216
          %1218 = vadd.xlane.f32.xlu0 %v1191
          %v1219 = vpop.xlane.xlu0 %1218
          %1220 = vadd.xlane.f32.xlu0 %v1192
          %v1221 = vpop.xlane.xlu0 %1220
          %1222 = vadd.xlane.f32.xlu0 %v1193
          %v1223 = vpop.xlane.xlu0 %1222
          %1224 = vadd.xlane.f32.xlu0 %v1194
          %v1225 = vpop.xlane.xlu0 %1224
          %1226 = vadd.xlane.f32.xlu0 %v1195
          %v1227 = vpop.xlane.xlu0 %1226
          %v1228 = vmax.f32 %v1197, 1e-24
          %v1229 = vmax.f32 %v1199, 1e-24
          %v1230 = vmax.f32 %v1201, 1e-24
          %v1231 = vmax.f32 %v1203, 1e-24
          %v1232 = vmax.f32 %v1205, 1e-24
          %v1233 = vmax.f32 %v1207, 1e-24
          %v1234 = vmax.f32 %v1209, 1e-24
          %v1235 = vmax.f32 %v1211, 1e-24
          %v1236 = vmax.f32 %v1213, 1e-24
          %v1237 = vmax.f32 %v1215, 1e-24
          %v1238 = vmax.f32 %v1217, 1e-24
          %v1239 = vmax.f32 %v1219, 1e-24
          %v1240 = vmax.f32 %v1221, 1e-24
          %v1241 = vmax.f32 %v1223, 1e-24
          %v1242 = vmax.f32 %v1225, 1e-24
          %v1243 = vmax.f32 %v1227, 1e-24
          %v1244 = vrsqrt.pop %v1228
          %v1245 = vrsqrt.pop %v1229
          %v1246 = vrsqrt.pop %v1230
          %v1247 = vrsqrt.pop %v1231
          %v1248 = vrsqrt.pop %v1232
          %v1249 = vrsqrt.pop %v1233
          %v1250 = vrsqrt.pop %v1234
          %v1251 = vrsqrt.pop %v1235
          %v1252 = vrsqrt.pop %v1236
          %v1253 = vrsqrt.pop %v1237
          %v1254 = vrsqrt.pop %v1238
          %v1255 = vrsqrt.pop %v1239
          %v1256 = vrsqrt.pop %v1240
          %v1257 = vrsqrt.pop %v1241
          %v1258 = vrsqrt.pop %v1242
          %v1259 = vrsqrt.pop %v1243
          %v1260 = vmul.f32 %v1118, %v1244
          %v1261 = vmul.f32 %v1121, %v1245
          %v1262 = vmul.f32 %v1126, %v1246
          %v1263 = vmul.f32 %v1129, %v1247
          %v1264 = vmul.f32 %v1134, %v1248
          %v1265 = vmul.f32 %v1137, %v1249
          %v1266 = vmul.f32 %v1142, %v1250
          %v1267 = vmul.f32 %v1145, %v1251
          %v1268 = vmul.f32 %v1150, %v1252
          %v1269 = vmul.f32 %v1153, %v1253
          %v1270 = vmul.f32 %v1158, %v1254
          %v1271 = vmul.f32 %v1161, %v1255
          %v1272 = vmul.f32 %v1166, %v1256
          %v1273 = vmul.f32 %v1169, %v1257
          %v1274 = vmul.f32 %v1174, %v1258
          %v1275 = vmul.f32 %v1177, %v1259
          %vm1276 = vcmp.ge.f32.partialorder %v1260, 0.0
          %vm1277 = vcmp.ge.f32.partialorder %v1261, 0.0
          %vm1278 = vcmp.ge.f32.partialorder %v1262, 0.0
          %vm1279 = vcmp.ge.f32.partialorder %v1263, 0.0
          %vm1280 = vcmp.ge.f32.partialorder %v1264, 0.0
          %vm1281 = vcmp.ge.f32.partialorder %v1265, 0.0
          %vm1282 = vcmp.ge.f32.partialorder %v1266, 0.0
          %vm1283 = vcmp.ge.f32.partialorder %v1267, 0.0
          %vm1284 = vcmp.ge.f32.partialorder %v1268, 0.0
          %vm1285 = vcmp.ge.f32.partialorder %v1269, 0.0
          %vm1286 = vcmp.ge.f32.partialorder %v1270, 0.0
          %vm1287 = vcmp.ge.f32.partialorder %v1271, 0.0
          %vm1288 = vcmp.ge.f32.partialorder %v1272, 0.0
          %vm1289 = vcmp.ge.f32.partialorder %v1273, 0.0
          %vm1290 = vcmp.ge.f32.partialorder %v1274, 0.0
          %vm1291 = vcmp.ge.f32.partialorder %v1275, 0.0
          %v1292 = vmul.f32 %v1260, 0.01
          %v1293 = vmul.f32 %v1261, 0.01
          %v1294 = vmul.f32 %v1262, 0.01
          %v1295 = vmul.f32 %v1263, 0.01
          %v1296 = vmul.f32 %v1264, 0.01
          %v1297 = vmul.f32 %v1265, 0.01
          %v1298 = vmul.f32 %v1266, 0.01
          %v1299 = vmul.f32 %v1267, 0.01
          %v1300 = vmul.f32 %v1268, 0.01
          %v1301 = vmul.f32 %v1269, 0.01
          %v1302 = vmul.f32 %v1270, 0.01
          %v1303 = vmul.f32 %v1271, 0.01
          %v1304 = vmul.f32 %v1272, 0.01
          %v1305 = vmul.f32 %v1273, 0.01
          %v1306 = vmul.f32 %v1274, 0.01
          %v1307 = vmul.f32 %v1275, 0.01
          %v1308 = vsel %vm1276, %v1260, %v1292
          %v1309 = vsel %vm1277, %v1261, %v1293
          %v1310 = vsel %vm1278, %v1262, %v1294
          %v1311 = vsel %vm1279, %v1263, %v1295
          %v1312 = vsel %vm1280, %v1264, %v1296
          %v1313 = vsel %vm1281, %v1265, %v1297
          %v1314 = vsel %vm1282, %v1266, %v1298
          %v1315 = vsel %vm1283, %v1267, %v1299
          %v1316 = vsel %vm1284, %v1268, %v1300
          %v1317 = vsel %vm1285, %v1269, %v1301
          %v1318 = vsel %vm1286, %v1270, %v1302
          %v1319 = vsel %vm1287, %v1271, %v1303
          %v1320 = vsel %vm1288, %v1272, %v1304
          %v1321 = vsel %vm1289, %v1273, %v1305
          %v1322 = vsel %vm1290, %v1274, %v1306
          %v1323 = vsel %vm1291, %v1275, %v1307
          %1324 = vst [vmem:[%s479] sm:$0xff] %v1308
          %1325 = vst [vmem:[%s479 + $0x8] sm:$0xff] %v1309
          %1326 = vst [vmem:[%s479 + $0x10] sm:$0xff] %v1310
          %1327 = vst [vmem:[%s479 + $0x18] sm:$0xff] %v1311
          %1328 = vst [vmem:[%s479 + $0x20] sm:$0xff] %v1312
          %1329 = vst [vmem:[%s479 + $0x28] sm:$0xff] %v1313
          %1330 = vst [vmem:[%s479 + $0x30] sm:$0xff] %v1314
          %1331 = vst [vmem:[%s479 + $0x38] sm:$0xff] %v1315
          %1332 = vst [vmem:[%s479 + $0x40] sm:$0xff] %v1316
          %1333 = vst [vmem:[%s479 + $0x48] sm:$0xff] %v1317
          %1334 = vst [vmem:[%s479 + $0x50] sm:$0xff] %v1318
          %1335 = vst [vmem:[%s479 + $0x58] sm:$0xff] %v1319
          %1336 = vst [vmem:[%s479 + $0x60] sm:$0xff] %v1320
          %1337 = vst [vmem:[%s479 + $0x68] sm:$0xff] %v1321
          %1338 = vst [vmem:[%s479 + $0x70] sm:$0xff] %v1322
          %1339 = vst [vmem:[%s479 + $0x78] sm:$0xff] %v1323
        $region105: #{tpu_custom_call.1} parent=80 // pred_fallthru
          _
        %s1340 = sand.u32 %s194, 1
        %s1341 = scalar_lea.sflag [#allocation6], %s1340
        %s1342 = sand.u32 %s194, 1
        %s1343 = smul.addr %s1342, 128
        %s1344 = scalar_lea.vmem [#allocation10], %s1343
        // Predicated region
        $region106: #{tpu_custom_call.1} parent=80 // pred_check
          %p1345 = pneg %p204
        $region107: #{tpu_custom_call.1} parent=80 // pred_check_branch
          %1347 = sbr.rel (%p1345) target = $region109
        $region108: #{tpu_custom_call.1} parent=80 // pred_region
          %s1348 = smul.u32 16, %s30
          %s1350 = ssub.s32 2048, 2048
          %1351 = vsyncadd %s1341, %s1350
          %s1352 = smul.addr %s1348, 128
          %s1353 = scalar_lea.hbm %s6, %s1352
          %s1354 = sshll.u32 %s1344, 4
          %s1355 = int_to_ptr.vmem [resolvable:$true] %s1354
          %1360 = dma.vmem_to_hbm [thread:$0]  %s1355, 2048, %s1353, %s1341, 128, 128, 8
        $region109: #{tpu_custom_call.1} parent=80 // pred_fallthru
          _
      $region81: #{tpu_custom_call.1} parent=5 // pred_fallthru
        _
      %p1361 = scmp.le.s32.totalorder 2, %s21
      // Predicated region
      $region110: #{tpu_custom_call.1} parent=5 // pred_check
        %p1362 = pneg %p1361
      $region111: #{tpu_custom_call.1} parent=5 // pred_check_branch
        %1364 = sbr.rel (%p1362) target = $region113
      $region112: #{tpu_custom_call.1} parent=5 // pred_region
        %s1365 = ssub.s32 %s21, 2
        // Predicated region
        $region114: #{tpu_custom_call.1} parent=112 // pred_check
          %p1366 = pneg %p210
        $region115: #{tpu_custom_call.1} parent=112 // pred_check_branch
          %1368 = sbr.rel (%p1366) target = $region117
        $region116: #{tpu_custom_call.1} parent=112 // pred_region
          %s1369 = sand.u32 %s195, 1
          %s1370 = scalar_lea.sflag [#allocation6], %s1369
          %s1371 = sand.u32 %s195, 1
          %s1372 = smul.addr %s1371, 128
          %s1373 = scalar_lea.vmem [#allocation10], %s1372
          %1374 = dma.done %s1370, 2048
        $region117: #{tpu_custom_call.1} parent=112 // pred_fallthru
          _
      $region113: #{tpu_custom_call.1} parent=5 // pred_fallthru
        _
    $region6: #{tpu_custom_call.1} parent=1 // loop_footer
      %s25 = sadd.s32 1, %s21
    $region7: #{tpu_custom_call.1} parent=1 // loop_footer_branch
      %20 = sbr.rel target = $region3
    $region8: #{tpu_custom_call.1} parent=1 // loop_exit
      _
    %1375 = vsyncpa [#allocation5], 1
    %s1376 = scalar_lea.sflag [#allocation5], 1
    %1377 = vsyncpa %s1376, 1
    %1378 = vsyncpa [#allocation8], 1
    %s1379 = scalar_lea.sflag [#allocation8], 1
    %1380 = vsyncpa %s1379, 1
    %1381 = vsyncpa [#allocation6], 1
    %s1382 = scalar_lea.sflag [#allocation6], 1
    %1383 = vsyncpa %s1382, 1

</llo_original>
